<compile_context>
chip_gen: v7x
topology: tpu7x:2x2x1
jax: 0.10.0
libtpu: 0.0.40
codegen_flags: <defaults>
</compile_context>

<pallas_src>
import jax
import jax.numpy as jnp
from jax.experimental import pallas as pl
from jax.experimental.pallas import tpu as pltpu
import numpy as np


def make_rnn_kernel(num_layers, B, T, H, D, O):
    def kernel(*refs):
        x_ref = refs[0]                                              # (T*B, D), time-major
        layer_refs = refs[1:1 + 3 * num_layers]                      # (W_ihT, W_hhT, b) per layer
        w1t_ref, b1_ref, w2t_ref, b2_ref = refs[1 + 3 * num_layers:1 + 3 * num_layers + 4]
        out_ref = refs[1 + 3 * num_layers + 4]

        # Load resident weights once (no reloads inside the recurrence).
        WihT = [layer_refs[3 * l + 0][...] for l in range(num_layers)]   # (D_in, H)
        WhhT = [layer_refs[3 * l + 1][...] for l in range(num_layers)]   # (H, H)

        # Hoist bias broadcasts for layers >= 1 (broadcast exactly once).
        Bb = [jnp.broadcast_to(layer_refs[3 * l + 2][...], (B, H))
              for l in range(1, num_layers)]

        # Layer-0 input projection for all timesteps as ONE batched matmul;
        # layer-0 combined bias folded in here (broadcast once).
        xw0 = (jnp.dot(x_ref[...], WihT[0], preferred_element_type=jnp.float32)
               + layer_refs[2][...])                                  # (T*B, H)

        hs = [jnp.zeros((B, H), jnp.float32) for _ in range(num_layers)]

        # T static & small -> fully unrolled, static slices only.
        for t in range(T):
            pre0 = xw0[t * B:(t + 1) * B, :] + jnp.dot(
                hs[0], WhhT[0], preferred_element_type=jnp.float32)
            hs[0] = jnp.tanh(pre0)
            inp = hs[0]
            for l in range(1, num_layers):
                pre = (jnp.dot(inp, WihT[l], preferred_element_type=jnp.float32)
                       + jnp.dot(hs[l], WhhT[l], preferred_element_type=jnp.float32)
                       + Bb[l - 1])
                hs[l] = jnp.tanh(pre)
                inp = hs[l]

        last = hs[num_layers - 1]                                     # == out[:, -1, :]

        # fc head: Linear(H,H) -> ReLU -> Linear(H,O), weights pre-transposed.
        z = jnp.dot(last, w1t_ref[...], preferred_element_type=jnp.float32) + b1_ref[...]
        z = jnp.maximum(z, 0.0)
        y = jnp.dot(z, w2t_ref[...], preferred_element_type=jnp.float32) + b2_ref[...]
        out_ref[...] = y.astype(out_ref.dtype)

    return kernel


def rnn_forward(x, params, *, hidden_dim, output_dim, num_layers):
    B, T, D = x.shape
    H, O = hidden_dim, output_dim

    # Host-side layout plumbing (one-time): time-major flatten + weight transposes.
    x_tbd = jnp.transpose(x, (1, 0, 2)).reshape(T * B, D)

    args = [x_tbd]
    for l in range(num_layers):
        W_ih, W_hh, b_ih, b_hh = params["rnn"][l]
        # PyTorch adds both biases every step; combining them is identical semantics.
        args += [jnp.transpose(W_ih), jnp.transpose(W_hh), (b_ih + b_hh).reshape(1, H)]
    W1, b1, W2, b2 = params["fc"]
    args += [jnp.transpose(W1), b1.reshape(1, H), jnp.transpose(W2), b2.reshape(1, O)]

    n_in = len(args)
    kernel = make_rnn_kernel(num_layers, B, T, H, D, O)

    return pl.pallas_call(
        kernel,
        out_shape=jax.ShapeDtypeStruct((B, O), jnp.float32),
        in_specs=[pl.BlockSpec(memory_space=pltpu.MemorySpace.VMEM)] * n_in,
        out_specs=pl.BlockSpec(memory_space=pltpu.MemorySpace.VMEM),
    )(*args)


def init_params(key, input_dim, hidden_dim, output_dim, num_layers):
    """Deterministic init mimicking PyTorch's U(-1/sqrt(H), 1/sqrt(H))."""
    H = hidden_dim
    k = 1.0 / np.sqrt(H)
    params = {"rnn": [], "fc": None}
    keys = jax.random.split(key, 4 * num_layers + 4)
    idx = 0
    for l in range(num_layers):
        d_in = input_dim if l == 0 else H
        W_ih = jax.random.uniform(keys[idx + 0], (H, d_in), jnp.float32, -k, k)
        W_hh = jax.random.uniform(keys[idx + 1], (H, H), jnp.float32, -k, k)
        b_ih = jax.random.uniform(keys[idx + 2], (H,), jnp.float32, -k, k)
        b_hh = jax.random.uniform(keys[idx + 3], (H,), jnp.float32, -k, k)
        params["rnn"].append((W_ih, W_hh, b_ih, b_hh))
        idx += 4
    W1 = jax.random.uniform(keys[idx + 0], (H, H), jnp.float32, -k, k)
    b1 = jax.random.uniform(keys[idx + 1], (H,), jnp.float32, -k, k)
    W2 = jax.random.uniform(keys[idx + 2], (output_dim, H), jnp.float32, -k, k)
    b2 = jax.random.uniform(keys[idx + 3], (output_dim,), jnp.float32, -k, k)
    params["fc"] = (W1, b1, W2, b2)
    return params


def reference_forward(x, params, *, hidden_dim, output_dim, num_layers):
    """Pure-JAX reference matching PyTorch semantics (for correctness check)."""
    B, T, _ = x.shape
    H = hidden_dim
    h = [jnp.zeros((B, H), jnp.float32) for _ in range(num_layers)]
    for t in range(T):
        inp = x[:, t, :]
        for l in range(num_layers):
            W_ih, W_hh, b_ih, b_hh = params["rnn"][l]
            h[l] = jnp.tanh(inp @ W_ih.T + b_ih + h[l] @ W_hh.T + b_hh)
            inp = h[l]
    last = h[-1]
    W1, b1, W2, b2 = params["fc"]
    z = jnp.maximum(last @ W1.T + b1, 0.0)
    return z @ W2.T + b2


if __name__ == "__main__":
    B, T = 2, 8
    input_dim, hidden_dim, output_dim, num_layers = 16, 32, 4, 2

    key = jax.random.PRNGKey(0)
    k_x, k_p = jax.random.split(key)
    x = jax.random.normal(k_x, (B, T, input_dim), dtype=jnp.float32)
    params = init_params(k_p, input_dim, hidden_dim, output_dim, num_layers)

    out = rnn_forward(x, params, hidden_dim=hidden_dim,
                      output_dim=output_dim, num_layers=num_layers)
    out = jax.block_until_ready(out)

    ref = reference_forward(x, params, hidden_dim=hidden_dim,
                            output_dim=output_dim, num_layers=num_layers)
    assert out.shape == (B, output_dim)
    np.testing.assert_allclose(np.asarray(out), np.asarray(ref), rtol=1e-5, atol=1e-5)

    print("KERNEL_OK")
</pallas_src>

<mosaic_0001>
module attributes {stable_mosaic.version = 11 : i64} {
  func.func @kernel(%arg0: memref<16x16xf32, #tpu.memory_space<vmem>>, %arg1: memref<16x32xf32, #tpu.memory_space<vmem>>, %arg2: memref<32x32xf32, #tpu.memory_space<vmem>>, %arg3: memref<1x32xf32, #tpu.memory_space<vmem>>, %arg4: memref<32x32xf32, #tpu.memory_space<vmem>>, %arg5: memref<32x32xf32, #tpu.memory_space<vmem>>, %arg6: memref<1x32xf32, #tpu.memory_space<vmem>>, %arg7: memref<32x32xf32, #tpu.memory_space<vmem>>, %arg8: memref<1x32xf32, #tpu.memory_space<vmem>>, %arg9: memref<32x4xf32, #tpu.memory_space<vmem>>, %arg10: memref<1x4xf32, #tpu.memory_space<vmem>>, %arg11: memref<2x4xf32, #tpu.memory_space<vmem>>) attributes {dimension_semantics = [], scalar_prefetch = 0 : i64, scratch_operands = 0 : i64, tpu.core_type = #tpu.core_type<tc>} {
    %c0 = arith.constant 0 : index
    %c0_0 = arith.constant 0 : index
    %0 = vector.load %arg1[%c0, %c0_0] : memref<16x32xf32, #tpu.memory_space<vmem>>, vector<16x32xf32>
    %c0_1 = arith.constant 0 : index
    %c0_2 = arith.constant 0 : index
    %1 = vector.load %arg4[%c0_1, %c0_2] : memref<32x32xf32, #tpu.memory_space<vmem>>, vector<32x32xf32>
    %c0_3 = arith.constant 0 : index
    %c0_4 = arith.constant 0 : index
    %2 = vector.load %arg2[%c0_3, %c0_4] : memref<32x32xf32, #tpu.memory_space<vmem>>, vector<32x32xf32>
    %c0_5 = arith.constant 0 : index
    %c0_6 = arith.constant 0 : index
    %3 = vector.load %arg5[%c0_5, %c0_6] : memref<32x32xf32, #tpu.memory_space<vmem>>, vector<32x32xf32>
    %c0_7 = arith.constant 0 : index
    %c0_8 = arith.constant 0 : index
    %4 = vector.load %arg6[%c0_7, %c0_8] : memref<1x32xf32, #tpu.memory_space<vmem>>, vector<1x32xf32>
    %5 = vector.shape_cast %4 : vector<1x32xf32> to vector<1x32xf32>
    %6 = vector.broadcast %5 : vector<1x32xf32> to vector<2x32xf32>
    %c0_9 = arith.constant 0 : index
    %c0_10 = arith.constant 0 : index
    %7 = vector.load %arg0[%c0_9, %c0_10] : memref<16x16xf32, #tpu.memory_space<vmem>>, vector<16x16xf32>
    %cst = arith.constant dense<0.000000e+00> : vector<16x32xf32>
    %8 = tpu.matmul %7, %0, %cst {dimension_numbers = #tpu.dot_dimension_numbers<[1], [0], [0], [1], [0, 0, 1, 1], [], []>} : vector<16x16xf32>, vector<16x32xf32>, vector<16x32xf32> -> vector<16x32xf32>
    %c0_11 = arith.constant 0 : index
    %c0_12 = arith.constant 0 : index
    %9 = vector.load %arg3[%c0_11, %c0_12] : memref<1x32xf32, #tpu.memory_space<vmem>>, vector<1x32xf32>
    %10 = vector.broadcast %9 : vector<1x32xf32> to vector<16x32xf32>
    %11 = arith.addf %8, %10 : vector<16x32xf32>
    %cst_13 = arith.constant 0.000000e+00 : f32
    %12 = vector.broadcast %cst_13 : f32 to vector<2x32xf32>
    %cst_14 = arith.constant 0.000000e+00 : f32
    %13 = vector.broadcast %cst_14 : f32 to vector<2x32xf32>
    %14 = vector.extract_strided_slice %11 {offsets = [0, 0], sizes = [2, 32], strides = [1, 1]} : vector<16x32xf32> to vector<2x32xf32>
    %cst_15 = arith.constant dense<0.000000e+00> : vector<2x32xf32>
    %15 = tpu.matmul %12, %2, %cst_15 {dimension_numbers = #tpu.dot_dimension_numbers<[1], [0], [0], [1], [0, 0, 1, 1], [], []>} : vector<2x32xf32>, vector<32x32xf32>, vector<2x32xf32> -> vector<2x32xf32>
    %16 = arith.addf %14, %15 : vector<2x32xf32>
    %17 = math.tanh %16 : vector<2x32xf32>
    %cst_16 = arith.constant dense<0.000000e+00> : vector<2x32xf32>
    %18 = tpu.matmul %17, %1, %cst_16 {dimension_numbers = #tpu.dot_dimension_numbers<[1], [0], [0], [1], [0, 0, 1, 1], [], []>} : vector<2x32xf32>, vector<32x32xf32>, vector<2x32xf32> -> vector<2x32xf32>
    %cst_17 = arith.constant dense<0.000000e+00> : vector<2x32xf32>
    %19 = tpu.matmul %13, %3, %cst_17 {dimension_numbers = #tpu.dot_dimension_numbers<[1], [0], [0], [1], [0, 0, 1, 1], [], []>} : vector<2x32xf32>, vector<32x32xf32>, vector<2x32xf32> -> vector<2x32xf32>
    %20 = arith.addf %18, %19 : vector<2x32xf32>
    %21 = arith.addf %20, %6 : vector<2x32xf32>
    %22 = math.tanh %21 : vector<2x32xf32>
    %23 = vector.extract_strided_slice %11 {offsets = [2, 0], sizes = [2, 32], strides = [1, 1]} : vector<16x32xf32> to vector<2x32xf32>
    %cst_18 = arith.constant dense<0.000000e+00> : vector<2x32xf32>
    %24 = tpu.matmul %17, %2, %cst_18 {dimension_numbers = #tpu.dot_dimension_numbers<[1], [0], [0], [1], [0, 0, 1, 1], [], []>} : vector<2x32xf32>, vector<32x32xf32>, vector<2x32xf32> -> vector<2x32xf32>
    %25 = arith.addf %23, %24 : vector<2x32xf32>
    %26 = math.tanh %25 : vector<2x32xf32>
    %cst_19 = arith.constant dense<0.000000e+00> : vector<2x32xf32>
    %27 = tpu.matmul %26, %1, %cst_19 {dimension_numbers = #tpu.dot_dimension_numbers<[1], [0], [0], [1], [0, 0, 1, 1], [], []>} : vector<2x32xf32>, vector<32x32xf32>, vector<2x32xf32> -> vector<2x32xf32>
    %cst_20 = arith.constant dense<0.000000e+00> : vector<2x32xf32>
    %28 = tpu.matmul %22, %3, %cst_20 {dimension_numbers = #tpu.dot_dimension_numbers<[1], [0], [0], [1], [0, 0, 1, 1], [], []>} : vector<2x32xf32>, vector<32x32xf32>, vector<2x32xf32> -> vector<2x32xf32>
    %29 = arith.addf %27, %28 : vector<2x32xf32>
    %30 = arith.addf %29, %6 : vector<2x32xf32>
    %31 = math.tanh %30 : vector<2x32xf32>
    %32 = vector.extract_strided_slice %11 {offsets = [4, 0], sizes = [2, 32], strides = [1, 1]} : vector<16x32xf32> to vector<2x32xf32>
    %cst_21 = arith.constant dense<0.000000e+00> : vector<2x32xf32>
    %33 = tpu.matmul %26, %2, %cst_21 {dimension_numbers = #tpu.dot_dimension_numbers<[1], [0], [0], [1], [0, 0, 1, 1], [], []>} : vector<2x32xf32>, vector<32x32xf32>, vector<2x32xf32> -> vector<2x32xf32>
    %34 = arith.addf %32, %33 : vector<2x32xf32>
    %35 = math.tanh %34 : vector<2x32xf32>
    %cst_22 = arith.constant dense<0.000000e+00> : vector<2x32xf32>
    %36 = tpu.matmul %35, %1, %cst_22 {dimension_numbers = #tpu.dot_dimension_numbers<[1], [0], [0], [1], [0, 0, 1, 1], [], []>} : vector<2x32xf32>, vector<32x32xf32>, vector<2x32xf32> -> vector<2x32xf32>
    %cst_23 = arith.constant dense<0.000000e+00> : vector<2x32xf32>
    %37 = tpu.matmul %31, %3, %cst_23 {dimension_numbers = #tpu.dot_dimension_numbers<[1], [0], [0], [1], [0, 0, 1, 1], [], []>} : vector<2x32xf32>, vector<32x32xf32>, vector<2x32xf32> -> vector<2x32xf32>
    %38 = arith.addf %36, %37 : vector<2x32xf32>
    %39 = arith.addf %38, %6 : vector<2x32xf32>
    %40 = math.tanh %39 : vector<2x32xf32>
    %41 = vector.extract_strided_slice %11 {offsets = [6, 0], sizes = [2, 32], strides = [1, 1]} : vector<16x32xf32> to vector<2x32xf32>
    %cst_24 = arith.constant dense<0.000000e+00> : vector<2x32xf32>
    %42 = tpu.matmul %35, %2, %cst_24 {dimension_numbers = #tpu.dot_dimension_numbers<[1], [0], [0], [1], [0, 0, 1, 1], [], []>} : vector<2x32xf32>, vector<32x32xf32>, vector<2x32xf32> -> vector<2x32xf32>
    %43 = arith.addf %41, %42 : vector<2x32xf32>
    %44 = math.tanh %43 : vector<2x32xf32>
    %cst_25 = arith.constant dense<0.000000e+00> : vector<2x32xf32>
    %45 = tpu.matmul %44, %1, %cst_25 {dimension_numbers = #tpu.dot_dimension_numbers<[1], [0], [0], [1], [0, 0, 1, 1], [], []>} : vector<2x32xf32>, vector<32x32xf32>, vector<2x32xf32> -> vector<2x32xf32>
    %cst_26 = arith.constant dense<0.000000e+00> : vector<2x32xf32>
    %46 = tpu.matmul %40, %3, %cst_26 {dimension_numbers = #tpu.dot_dimension_numbers<[1], [0], [0], [1], [0, 0, 1, 1], [], []>} : vector<2x32xf32>, vector<32x32xf32>, vector<2x32xf32> -> vector<2x32xf32>
    %47 = arith.addf %45, %46 : vector<2x32xf32>
    %48 = arith.addf %47, %6 : vector<2x32xf32>
    %49 = math.tanh %48 : vector<2x32xf32>
    %50 = vector.extract_strided_slice %11 {offsets = [8, 0], sizes = [2, 32], strides = [1, 1]} : vector<16x32xf32> to vector<2x32xf32>
    %cst_27 = arith.constant dense<0.000000e+00> : vector<2x32xf32>
    %51 = tpu.matmul %44, %2, %cst_27 {dimension_numbers = #tpu.dot_dimension_numbers<[1], [0], [0], [1], [0, 0, 1, 1], [], []>} : vector<2x32xf32>, vector<32x32xf32>, vector<2x32xf32> -> vector<2x32xf32>
    %52 = arith.addf %50, %51 : vector<2x32xf32>
    %53 = math.tanh %52 : vector<2x32xf32>
    %cst_28 = arith.constant dense<0.000000e+00> : vector<2x32xf32>
    %54 = tpu.matmul %53, %1, %cst_28 {dimension_numbers = #tpu.dot_dimension_numbers<[1], [0], [0], [1], [0, 0, 1, 1], [], []>} : vector<2x32xf32>, vector<32x32xf32>, vector<2x32xf32> -> vector<2x32xf32>
    %cst_29 = arith.constant dense<0.000000e+00> : vector<2x32xf32>
    %55 = tpu.matmul %49, %3, %cst_29 {dimension_numbers = #tpu.dot_dimension_numbers<[1], [0], [0], [1], [0, 0, 1, 1], [], []>} : vector<2x32xf32>, vector<32x32xf32>, vector<2x32xf32> -> vector<2x32xf32>
    %56 = arith.addf %54, %55 : vector<2x32xf32>
    %57 = arith.addf %56, %6 : vector<2x32xf32>
    %58 = math.tanh %57 : vector<2x32xf32>
    %59 = vector.extract_strided_slice %11 {offsets = [10, 0], sizes = [2, 32], strides = [1, 1]} : vector<16x32xf32> to vector<2x32xf32>
    %cst_30 = arith.constant dense<0.000000e+00> : vector<2x32xf32>
    %60 = tpu.matmul %53, %2, %cst_30 {dimension_numbers = #tpu.dot_dimension_numbers<[1], [0], [0], [1], [0, 0, 1, 1], [], []>} : vector<2x32xf32>, vector<32x32xf32>, vector<2x32xf32> -> vector<2x32xf32>
    %61 = arith.addf %59, %60 : vector<2x32xf32>
    %62 = math.tanh %61 : vector<2x32xf32>
    %cst_31 = arith.constant dense<0.000000e+00> : vector<2x32xf32>
    %63 = tpu.matmul %62, %1, %cst_31 {dimension_numbers = #tpu.dot_dimension_numbers<[1], [0], [0], [1], [0, 0, 1, 1], [], []>} : vector<2x32xf32>, vector<32x32xf32>, vector<2x32xf32> -> vector<2x32xf32>
    %cst_32 = arith.constant dense<0.000000e+00> : vector<2x32xf32>
    %64 = tpu.matmul %58, %3, %cst_32 {dimension_numbers = #tpu.dot_dimension_numbers<[1], [0], [0], [1], [0, 0, 1, 1], [], []>} : vector<2x32xf32>, vector<32x32xf32>, vector<2x32xf32> -> vector<2x32xf32>
    %65 = arith.addf %63, %64 : vector<2x32xf32>
    %66 = arith.addf %65, %6 : vector<2x32xf32>
    %67 = math.tanh %66 : vector<2x32xf32>
    %68 = vector.extract_strided_slice %11 {offsets = [12, 0], sizes = [2, 32], strides = [1, 1]} : vector<16x32xf32> to vector<2x32xf32>
    %cst_33 = arith.constant dense<0.000000e+00> : vector<2x32xf32>
    %69 = tpu.matmul %62, %2, %cst_33 {dimension_numbers = #tpu.dot_dimension_numbers<[1], [0], [0], [1], [0, 0, 1, 1], [], []>} : vector<2x32xf32>, vector<32x32xf32>, vector<2x32xf32> -> vector<2x32xf32>
    %70 = arith.addf %68, %69 : vector<2x32xf32>
    %71 = math.tanh %70 : vector<2x32xf32>
    %cst_34 = arith.constant dense<0.000000e+00> : vector<2x32xf32>
    %72 = tpu.matmul %71, %1, %cst_34 {dimension_numbers = #tpu.dot_dimension_numbers<[1], [0], [0], [1], [0, 0, 1, 1], [], []>} : vector<2x32xf32>, vector<32x32xf32>, vector<2x32xf32> -> vector<2x32xf32>
    %cst_35 = arith.constant dense<0.000000e+00> : vector<2x32xf32>
    %73 = tpu.matmul %67, %3, %cst_35 {dimension_numbers = #tpu.dot_dimension_numbers<[1], [0], [0], [1], [0, 0, 1, 1], [], []>} : vector<2x32xf32>, vector<32x32xf32>, vector<2x32xf32> -> vector<2x32xf32>
    %74 = arith.addf %72, %73 : vector<2x32xf32>
    %75 = arith.addf %74, %6 : vector<2x32xf32>
    %76 = math.tanh %75 : vector<2x32xf32>
    %77 = vector.extract_strided_slice %11 {offsets = [14, 0], sizes = [2, 32], strides = [1, 1]} : vector<16x32xf32> to vector<2x32xf32>
    %cst_36 = arith.constant dense<0.000000e+00> : vector<2x32xf32>
    %78 = tpu.matmul %71, %2, %cst_36 {dimension_numbers = #tpu.dot_dimension_numbers<[1], [0], [0], [1], [0, 0, 1, 1], [], []>} : vector<2x32xf32>, vector<32x32xf32>, vector<2x32xf32> -> vector<2x32xf32>
    %79 = arith.addf %77, %78 : vector<2x32xf32>
    %80 = math.tanh %79 : vector<2x32xf32>
    %cst_37 = arith.constant dense<0.000000e+00> : vector<2x32xf32>
    %81 = tpu.matmul %80, %1, %cst_37 {dimension_numbers = #tpu.dot_dimension_numbers<[1], [0], [0], [1], [0, 0, 1, 1], [], []>} : vector<2x32xf32>, vector<32x32xf32>, vector<2x32xf32> -> vector<2x32xf32>
    %cst_38 = arith.constant dense<0.000000e+00> : vector<2x32xf32>
    %82 = tpu.matmul %76, %3, %cst_38 {dimension_numbers = #tpu.dot_dimension_numbers<[1], [0], [0], [1], [0, 0, 1, 1], [], []>} : vector<2x32xf32>, vector<32x32xf32>, vector<2x32xf32> -> vector<2x32xf32>
    %83 = arith.addf %81, %82 : vector<2x32xf32>
    %84 = arith.addf %83, %6 : vector<2x32xf32>
    %85 = math.tanh %84 : vector<2x32xf32>
    %c0_39 = arith.constant 0 : index
    %c0_40 = arith.constant 0 : index
    %86 = vector.load %arg7[%c0_39, %c0_40] : memref<32x32xf32, #tpu.memory_space<vmem>>, vector<32x32xf32>
    %cst_41 = arith.constant dense<0.000000e+00> : vector<2x32xf32>
    %87 = tpu.matmul %85, %86, %cst_41 {dimension_numbers = #tpu.dot_dimension_numbers<[1], [0], [0], [1], [0, 0, 1, 1], [], []>} : vector<2x32xf32>, vector<32x32xf32>, vector<2x32xf32> -> vector<2x32xf32>
    %c0_42 = arith.constant 0 : index
    %c0_43 = arith.constant 0 : index
    %88 = vector.load %arg8[%c0_42, %c0_43] : memref<1x32xf32, #tpu.memory_space<vmem>>, vector<1x32xf32>
    %89 = vector.broadcast %88 : vector<1x32xf32> to vector<2x32xf32>
    %90 = arith.addf %87, %89 : vector<2x32xf32>
    %cst_44 = arith.constant 0.000000e+00 : f32
    %91 = vector.broadcast %cst_44 : f32 to vector<2x32xf32>
    %92 = arith.maximumf %90, %91 : vector<2x32xf32>
    %c0_45 = arith.constant 0 : index
    %c0_46 = arith.constant 0 : index
    %93 = vector.load %arg9[%c0_45, %c0_46] : memref<32x4xf32, #tpu.memory_space<vmem>>, vector<32x4xf32>
    %cst_47 = arith.constant dense<0.000000e+00> : vector<2x4xf32>
    %94 = tpu.matmul %92, %93, %cst_47 {dimension_numbers = #tpu.dot_dimension_numbers<[1], [0], [0], [1], [0, 0, 1, 1], [], []>} : vector<2x32xf32>, vector<32x4xf32>, vector<2x4xf32> -> vector<2x4xf32>
    %c0_48 = arith.constant 0 : index
    %c0_49 = arith.constant 0 : index
    %95 = vector.load %arg10[%c0_48, %c0_49] : memref<1x4xf32, #tpu.memory_space<vmem>>, vector<1x4xf32>
    %96 = vector.broadcast %95 : vector<1x4xf32> to vector<2x4xf32>
    %97 = arith.addf %94, %96 : vector<2x4xf32>
    %c0_50 = arith.constant 0 : index
    %c0_51 = arith.constant 0 : index
    %98 = vector.load %arg11[%c0_50, %c0_51] : memref<2x4xf32, #tpu.memory_space<vmem>>, vector<2x4xf32>
    tpu.vector_store %arg11[%c0_50, %c0_51], %97 {strides = array<i32>} : memref<2x4xf32, #tpu.memory_space<vmem>>, vector<2x4xf32>,
    return
  }
}

</mosaic_0001>

<llo_original>
// kernel: tpu_custom_call.1
$region0: #{tpu_custom_call.1}
  #allocation0 [shape = 'u32[]', space=smem, size = 0x4, offset = 0x4, fixed_abs, tag = 'smem constant byte address 0x4 - core index']
  #allocation1 [shape = 'u32[144,128]{1,0:T(1,128)}', space=vmem, size = 0x12000, scoped, tag = 'internal scratch']
  %s0 = inlined_call_operand.hbm [shape: f32[16,16], index: 0, kind: input, shape index: {}]
  %s1 = inlined_call_operand.hbm [shape: f32[16,32], index: 1, kind: input, shape index: {}]
  %s2 = inlined_call_operand.vmem [shape: f32[32,32], index: 2, kind: input, shape index: {}]
  %s3 = inlined_call_operand.vmem [shape: f32[1,32], index: 3, kind: input, shape index: {}]
  %s4 = inlined_call_operand.hbm [shape: f32[32,32], index: 4, kind: input, shape index: {}]
  %s5 = inlined_call_operand.hbm [shape: f32[32,32], index: 5, kind: input, shape index: {}]
  %s6 = inlined_call_operand.vmem [shape: f32[1,32], index: 6, kind: input, shape index: {}]
  %s7 = inlined_call_operand.hbm [shape: f32[32,32], index: 7, kind: input, shape index: {}]
  %s8 = inlined_call_operand.vmem [shape: f32[1,32], index: 8, kind: input, shape index: {}]
  %s9 = inlined_call_operand.vmem [shape: f32[32,4], index: 9, kind: input, shape index: {}]
  %s10 = inlined_call_operand.vmem [shape: f32[1,4], index: 10, kind: input, shape index: {}]
  %s11 = inlined_call_operand.hbm [shape: f32[2,4], index: 11, kind: output, shape index: {}]
  %s12 = sld [smem:[#allocation0]]
  $region74: #{tpu_custom_call.1} parent=0
    _
  %s14 = ssub.s32 1, %s12
  %s15 = scalar_select 0, %s14, %s12
  $region1: #{tpu_custom_call.1} parent=0
    #allocation2 [shape = 'u8[8192]{0}', space=vmem, size = 0x2000, scoped, tag = 'input window, operand 0, single buffered']
    #allocation3 [shape = 's32[1]{0}', space=sflag, size = 0x4, scoped, tag = 'scoped memory for tpu_custom_call.1']
    #allocation4 [shape = 's32[1]{0}', space=sflag, size = 0x4, scoped, tag = 'scoped memory for tpu_custom_call.1']
    #allocation5 [shape = 'u8[8192]{0}', space=vmem, size = 0x2000, scoped, tag = 'input window, operand 1, single buffered']
    #allocation6 [shape = 's32[1]{0}', space=sflag, size = 0x4, scoped, tag = 'scoped memory for tpu_custom_call.1']
    #allocation7 [shape = 'u8[16384]{0}', space=vmem, size = 0x4000, scoped, tag = 'input window, operand 4, single buffered']
    #allocation8 [shape = 'u8[16384]{0}', space=vmem, size = 0x4000, scoped, tag = 'input window, operand 5, single buffered']
    #allocation9 [shape = 's32[1]{0}', space=sflag, size = 0x4, scoped, tag = 'scoped memory for tpu_custom_call.1']
    #allocation10 [shape = 'u8[16384]{0}', space=vmem, size = 0x4000, scoped, tag = 'input window, operand 7, single buffered']
    #allocation11 [shape = 'u8[1024]{0}', space=vmem, size = 0x400, scoped, tag = 'output window, operand 0, single buffered']
    %16 = vsyncpa [#allocation3], 0
    %17 = vsyncpa [#allocation6], 0
    %18 = vsyncpa [#allocation9], 0
    %19 = vsyncpa [#allocation4], 0
    // Predicated region
    $region2: #{tpu_custom_call.1} parent=1 // pred_check
      _
    $region3: #{tpu_custom_call.1} parent=1 // pred_check_branch
      %21 = sbr.rel (0) target = $region5
    $region4: #{tpu_custom_call.1} parent=1 // pred_region
      %s23 = ssub.s32 256, 256
      %24 = vsyncadd [#allocation3], %s23
      %s25 = sshll.u32 [#allocation2], 4
      %s26 = int_to_ptr.vmem [resolvable:$true] %s25
      %31 = dma.hbm_to_vmem [thread:$0]  %s0, 256, %s26, [#allocation3], 128, 128, 8
    $region5: #{tpu_custom_call.1} parent=1 // pred_fallthru
      _
    // Predicated region
    $region6: #{tpu_custom_call.1} parent=1 // pred_check
      _
    $region7: #{tpu_custom_call.1} parent=1 // pred_check_branch
      %33 = sbr.rel (0) target = $region9
    $region8: #{tpu_custom_call.1} parent=1 // pred_region
      %s35 = ssub.s32 256, 256
      %36 = vsyncadd [#allocation6], %s35
      %s37 = sshll.u32 [#allocation5], 4
      %s38 = int_to_ptr.vmem [resolvable:$true] %s37
      %43 = dma.hbm_to_vmem [thread:$0]  %s1, 256, %s38, [#allocation6], 128, 128, 8
    $region9: #{tpu_custom_call.1} parent=1 // pred_fallthru
      _
    // Predicated region
    $region10: #{tpu_custom_call.1} parent=1 // pred_check
      _
    $region11: #{tpu_custom_call.1} parent=1 // pred_check_branch
      %45 = sbr.rel (0) target = $region13
    $region12: #{tpu_custom_call.1} parent=1 // pred_region
      _
    $region13: #{tpu_custom_call.1} parent=1 // pred_fallthru
      _
    // Predicated region
    $region14: #{tpu_custom_call.1} parent=1 // pred_check
      _
    $region15: #{tpu_custom_call.1} parent=1 // pred_check_branch
      %47 = sbr.rel (0) target = $region17
    $region16: #{tpu_custom_call.1} parent=1 // pred_region
      _
    $region17: #{tpu_custom_call.1} parent=1 // pred_fallthru
      _
    // Predicated region
    $region18: #{tpu_custom_call.1} parent=1 // pred_check
      _
    $region19: #{tpu_custom_call.1} parent=1 // pred_check_branch
      %49 = sbr.rel (0) target = $region21
    $region20: #{tpu_custom_call.1} parent=1 // pred_region
      %s51 = ssub.s32 512, 512
      %52 = vsyncadd [#allocation6], %s51
      %s53 = sshll.u32 [#allocation7], 4
      %s54 = int_to_ptr.vmem [resolvable:$true] %s53
      %59 = dma.hbm_to_vmem [thread:$0]  %s4, 512, %s54, [#allocation6], 128, 128, 8
    $region21: #{tpu_custom_call.1} parent=1 // pred_fallthru
      _
    // Predicated region
    $region22: #{tpu_custom_call.1} parent=1 // pred_check
      _
    $region23: #{tpu_custom_call.1} parent=1 // pred_check_branch
      %61 = sbr.rel (0) target = $region25
    $region24: #{tpu_custom_call.1} parent=1 // pred_region
      %s63 = ssub.s32 512, 512
      %64 = vsyncadd [#allocation9], %s63
      %s65 = sshll.u32 [#allocation8], 4
      %s66 = int_to_ptr.vmem [resolvable:$true] %s65
      %71 = dma.hbm_to_vmem [thread:$0]  %s5, 512, %s66, [#allocation9], 128, 128, 8
    $region25: #{tpu_custom_call.1} parent=1 // pred_fallthru
      _
    // Predicated region
    $region26: #{tpu_custom_call.1} parent=1 // pred_check
      _
    $region27: #{tpu_custom_call.1} parent=1 // pred_check_branch
      %73 = sbr.rel (0) target = $region29
    $region28: #{tpu_custom_call.1} parent=1 // pred_region
      _
    $region29: #{tpu_custom_call.1} parent=1 // pred_fallthru
      _
    // Predicated region
    $region30: #{tpu_custom_call.1} parent=1 // pred_check
      _
    $region31: #{tpu_custom_call.1} parent=1 // pred_check_branch
      %75 = sbr.rel (0) target = $region33
    $region32: #{tpu_custom_call.1} parent=1 // pred_region
      %s77 = ssub.s32 512, 512
      %78 = vsyncadd [#allocation9], %s77
      %s79 = sshll.u32 [#allocation10], 4
      %s80 = int_to_ptr.vmem [resolvable:$true] %s79
      %85 = dma.hbm_to_vmem [thread:$0]  %s7, 512, %s80, [#allocation9], 128, 128, 8
    $region33: #{tpu_custom_call.1} parent=1 // pred_fallthru
      _
    // Predicated region
    $region34: #{tpu_custom_call.1} parent=1 // pred_check
      _
    $region35: #{tpu_custom_call.1} parent=1 // pred_check_branch
      %87 = sbr.rel (0) target = $region37
    $region36: #{tpu_custom_call.1} parent=1 // pred_region
      _
    $region37: #{tpu_custom_call.1} parent=1 // pred_fallthru
      _
    // Predicated region
    $region38: #{tpu_custom_call.1} parent=1 // pred_check
      _
    $region39: #{tpu_custom_call.1} parent=1 // pred_check_branch
      %89 = sbr.rel (0) target = $region41
    $region40: #{tpu_custom_call.1} parent=1 // pred_region
      _
    $region41: #{tpu_custom_call.1} parent=1 // pred_fallthru
      _
    // Predicated region
    $region42: #{tpu_custom_call.1} parent=1 // pred_check
      _
    $region43: #{tpu_custom_call.1} parent=1 // pred_check_branch
      %91 = sbr.rel (0) target = $region45
    $region44: #{tpu_custom_call.1} parent=1 // pred_region
      _
    $region45: #{tpu_custom_call.1} parent=1 // pred_fallthru
      _
    // Predicated region
    $region46: #{tpu_custom_call.1} parent=1 // pred_check
      _
    $region47: #{tpu_custom_call.1} parent=1 // pred_check_branch
      %93 = sbr.rel (0) target = $region49
    $region48: #{tpu_custom_call.1} parent=1 // pred_region
      %94 = dma.done [#allocation3], 256
    $region49: #{tpu_custom_call.1} parent=1 // pred_fallthru
      _
    // Predicated region
    $region50: #{tpu_custom_call.1} parent=1 // pred_check
      _
    $region51: #{tpu_custom_call.1} parent=1 // pred_check_branch
      %96 = sbr.rel (0) target = $region53
    $region52: #{tpu_custom_call.1} parent=1 // pred_region
      %97 = dma.done [#allocation6], 256
    $region53: #{tpu_custom_call.1} parent=1 // pred_fallthru
      _
    // Predicated region
    $region54: #{tpu_custom_call.1} parent=1 // pred_check
      _
    $region55: #{tpu_custom_call.1} parent=1 // pred_check_branch
      %99 = sbr.rel (0) target = $region57
    $region56: #{tpu_custom_call.1} parent=1 // pred_region
      %100 = dma.done [#allocation6], 512
    $region57: #{tpu_custom_call.1} parent=1 // pred_fallthru
      _
    // Predicated region
    $region58: #{tpu_custom_call.1} parent=1 // pred_check
      _
    $region59: #{tpu_custom_call.1} parent=1 // pred_check_branch
      %102 = sbr.rel (0) target = $region61
    $region60: #{tpu_custom_call.1} parent=1 // pred_region
      %103 = dma.done [#allocation9], 512
    $region61: #{tpu_custom_call.1} parent=1 // pred_fallthru
      _
    // Predicated region
    $region62: #{tpu_custom_call.1} parent=1 // pred_check
      _
    $region63: #{tpu_custom_call.1} parent=1 // pred_check_branch
      %105 = sbr.rel (0) target = $region65
    $region64: #{tpu_custom_call.1} parent=1 // pred_region
      %106 = dma.done [#allocation9], 512
    $region65: #{tpu_custom_call.1} parent=1 // pred_fallthru
      _
    %v107 = vld [vmem:[#allocation5] sm:$0xff]
    %v108 = vld [vmem:[#allocation5 + $0x8] sm:$0xff]
    %v109 = vld [vmem:[#allocation7] sm:$0xff]
    %v110 = vld [vmem:[#allocation7 + $0x8] sm:$0xff]
    %v111 = vld [vmem:[#allocation7 + $0x10] sm:$0xff]
    %v112 = vld [vmem:[#allocation7 + $0x18] sm:$0xff]
    %v113 = vld [vmem:[%s2] sm:$0xff]
    %v114 = vld [vmem:[%s2 + $0x8] sm:$0xff]
    %v115 = vld [vmem:[%s2 + $0x10] sm:$0xff]
    %v116 = vld [vmem:[%s2 + $0x18] sm:$0xff]
    %v117 = vld [vmem:[#allocation8] sm:$0xff]
    %v118 = vld [vmem:[#allocation8 + $0x8] sm:$0xff]
    %v119 = vld [vmem:[#allocation8 + $0x10] sm:$0xff]
    %v120 = vld [vmem:[#allocation8 + $0x18] sm:$0xff]
    %v121 = vld [vmem:[%s6] sm:$0x1]
    %v123 = vlaneseq
    %v124 = vshrl.u32 %v123, 7
    %v125 = vsub.s32 0, %v124
    %v126 = vrot.slane %v121, %v125
    %v128 = vld [vmem:[#allocation2] sm:$0xff]
    %v129 = vld [vmem:[#allocation2 + $0x8] sm:$0xff]
    %v130 = vld [vmem:[%s3] sm:$0x1]
    %v132 = vlaneseq
    %v133 = vshrl.u32 %v132, 7
    %v134 = vsub.s32 0, %v133
    %v135 = vrot.slane %v130, %v134
    %vm137 = vcmask 130048
    %v139 = vsel %vm137, %v128, 0
    %v142 = vsel %vm137, %v129, 0
    %144 = vmatprep.subr.mxu0 0.0
    %145 = vmatpush1.msra.mxu0 %v107
    %146 = vmatprep.subr.mxu0 0.0
    %147 = vmatpush1.msra.mxu0 %v108
    %148 = vmatprep.subr.mxu0 0.0
    %149 = vmatpush1.msra.mxu0 0.0
    %150 = vmatprep.subr.mxu0 0.0
    %151 = vmatpush1.msra.mxu0 0.0
    %152 = vmatprep.subr.mxu0 0.0
    %153 = vmatpush1.msra.mxu0 0.0
    %154 = vmatprep.subr.mxu0 0.0
    %155 = vmatpush1.msra.mxu0 0.0
    %156 = vmatprep.subr.mxu0 0.0
    %157 = vmatpush1.msra.mxu0 0.0
    %158 = vmatprep.subr.mxu0 0.0
    %159 = vmatpush1.msra.mxu0 0.0
    %160 = vmatprep.subr.mxu0 0.0
    %161 = vmatpush1.msra.mxu0 0.0
    %162 = vmatprep.subr.mxu0 0.0
    %163 = vmatpush1.msra.mxu0 0.0
    %164 = vmatprep.subr.mxu0 0.0
    %165 = vmatpush1.msra.mxu0 0.0
    %166 = vmatprep.subr.mxu0 0.0
    %167 = vmatpush1.msra.mxu0 0.0
    %168 = vmatprep.subr.mxu0 0.0
    %169 = vmatpush1.msra.mxu0 0.0
    %170 = vmatprep.subr.mxu0 0.0
    %171 = vmatpush1.msra.mxu0 0.0
    %172 = vmatprep.subr.mxu0 0.0
    %173 = vmatpush1.msra.mxu0 0.0
    %174 = vmatprep.subr.mxu0 0.0
    %175 = vmatpush1.msra.mxu0 0.0
    %176 = vmatprep.subr.mxu0 0.0
    %177 = vmatpush1.msra.mxu0 0.0
    %178 = vmatprep.subr.mxu0 0.0
    %179 = vmatpush1.msra.mxu0 0.0
    %180 = vmatprep.subr.mxu0 0.0
    %181 = vmatpush1.msra.mxu0 0.0
    %182 = vmatprep.subr.mxu0 0.0
    %183 = vmatpush1.msra.mxu0 0.0
    %184 = vmatprep.subr.mxu0 0.0
    %185 = vmatpush1.msra.mxu0 0.0
    %186 = vmatprep.subr.mxu0 0.0
    %187 = vmatpush1.msra.mxu0 0.0
    %188 = vmatprep.subr.mxu0 0.0
    %189 = vmatpush1.msra.mxu0 0.0
    %190 = vmatprep.subr.mxu0 0.0
    %191 = vmatpush1.msra.mxu0 0.0
    %192 = vmatprep.subr.mxu0 0.0
    %193 = vmatpush1.msra.mxu0 0.0
    %194 = vmatprep.subr.mxu0 0.0
    %195 = vmatpush1.msra.mxu0 0.0
    %196 = vmatprep.subr.mxu0 0.0
    %197 = vmatpush1.msra.mxu0 0.0
    %198 = vmatprep.subr.mxu0 0.0
    %199 = vmatpush1.msra.mxu0 0.0
    %200 = vmatprep.subr.mxu0 0.0
    %201 = vmatpush1.msra.mxu0 0.0
    %202 = vmatprep.subr.mxu0 0.0
    %203 = vmatpush1.msra.mxu0 0.0
    %204 = vmatprep.subr.mxu0 0.0
    %205 = vmatpush1.msra.mxu0 0.0
    %206 = vmatprep.subr.mxu0 0.0
    %207 = vmatpush1.msra.mxu0 0.0
    %208 = vmatprep.mubr.f32.mxu0 0.0
    %209 = vmatmul.mubr.f32.gmra.mrb[0].mxu0 %v139
    %v210 = vpop.f32.mrb[0].mxu0
    %v211 = vadd.f32 %v135, %v210
    %v212 = vpop.f32.mrb[0].mxu0
    %213 = vmatprep.mubr.f32.mxu0 0.0
    %214 = vmatmul.mubr.f32.gmra.mrb[0].mxu0 %v142
    %v215 = vpop.f32.mrb[0].mxu0
    %v216 = vadd.f32 %v135, %v215
    %v217 = vpop.f32.mrb[0].mxu0
    %218 = vdwg.mxu0
    %vm219 = vcmask 261120
    %v221 = vsel %vm219, 0.0, 0
    %223 = vmatprep.subr.mxu0 0.0
    %224 = vmatpush1.msra.mxu0 %v113
    %225 = vmatprep.subr.mxu0 0.0
    %226 = vmatpush1.msra.mxu0 %v114
    %227 = vmatprep.subr.mxu0 0.0
    %228 = vmatpush1.msra.mxu0 %v115
    %229 = vmatprep.subr.mxu0 0.0
    %230 = vmatpush1.msra.mxu0 %v116
    %231 = vmatprep.subr.mxu0 0.0
    %232 = vmatpush1.msra.mxu0 0.0
    %233 = vmatprep.subr.mxu0 0.0
    %234 = vmatpush1.msra.mxu0 0.0
    %235 = vmatprep.subr.mxu0 0.0
    %236 = vmatpush1.msra.mxu0 0.0
    %237 = vmatprep.subr.mxu0 0.0
    %238 = vmatpush1.msra.mxu0 0.0
    %239 = vmatprep.subr.mxu0 0.0
    %240 = vmatpush1.msra.mxu0 0.0
    %241 = vmatprep.subr.mxu0 0.0
    %242 = vmatpush1.msra.mxu0 0.0
    %243 = vmatprep.subr.mxu0 0.0
    %244 = vmatpush1.msra.mxu0 0.0
    %245 = vmatprep.subr.mxu0 0.0
    %246 = vmatpush1.msra.mxu0 0.0
    %247 = vmatprep.subr.mxu0 0.0
    %248 = vmatpush1.msra.mxu0 0.0
    %249 = vmatprep.subr.mxu0 0.0
    %250 = vmatpush1.msra.mxu0 0.0
    %251 = vmatprep.subr.mxu0 0.0
    %252 = vmatpush1.msra.mxu0 0.0
    %253 = vmatprep.subr.mxu0 0.0
    %254 = vmatpush1.msra.mxu0 0.0
    %255 = vmatprep.subr.mxu0 0.0
    %256 = vmatpush1.msra.mxu0 0.0
    %257 = vmatprep.subr.mxu0 0.0
    %258 = vmatpush1.msra.mxu0 0.0
    %259 = vmatprep.subr.mxu0 0.0
    %260 = vmatpush1.msra.mxu0 0.0
    %261 = vmatprep.subr.mxu0 0.0
    %262 = vmatpush1.msra.mxu0 0.0
    %263 = vmatprep.subr.mxu0 0.0
    %264 = vmatpush1.msra.mxu0 0.0
    %265 = vmatprep.subr.mxu0 0.0
    %266 = vmatpush1.msra.mxu0 0.0
    %267 = vmatprep.subr.mxu0 0.0
    %268 = vmatpush1.msra.mxu0 0.0
    %269 = vmatprep.subr.mxu0 0.0
    %270 = vmatpush1.msra.mxu0 0.0
    %271 = vmatprep.subr.mxu0 0.0
    %272 = vmatpush1.msra.mxu0 0.0
    %273 = vmatprep.subr.mxu0 0.0
    %274 = vmatpush1.msra.mxu0 0.0
    %275 = vmatprep.subr.mxu0 0.0
    %276 = vmatpush1.msra.mxu0 0.0
    %277 = vmatprep.subr.mxu0 0.0
    %278 = vmatpush1.msra.mxu0 0.0
    %279 = vmatprep.subr.mxu0 0.0
    %280 = vmatpush1.msra.mxu0 0.0
    %281 = vmatprep.subr.mxu0 0.0
    %282 = vmatpush1.msra.mxu0 0.0
    %283 = vmatprep.subr.mxu0 0.0
    %284 = vmatpush1.msra.mxu0 0.0
    %285 = vmatprep.subr.mxu0 0.0
    %286 = vmatpush1.msra.mxu0 0.0
    %287 = vmatprep.mubr.f32.mxu0 0.0
    %288 = vmatmul.mubr.f32.gmra.mrb[0].mxu0 %v221
    %v289 = vpop.f32.mrb[0].mxu0
    %v290 = vadd.f32 0.0, %v289
    %v291 = vpop.f32.mrb[0].mxu0
    %292 = vdwg.mxu0
    %v293 = vadd.f32 %v211, %v290
    %v294 = vtanh.pop %v293
    %295 = vmatprep.subr.mxu0 0.0
    %296 = vmatpush1.msra.mxu0 %v117
    %297 = vmatprep.subr.mxu0 0.0
    %298 = vmatpush1.msra.mxu0 %v118
    %299 = vmatprep.subr.mxu0 0.0
    %300 = vmatpush1.msra.mxu0 %v119
    %301 = vmatprep.subr.mxu0 0.0
    %302 = vmatpush1.msra.mxu0 %v120
    %303 = vmatprep.subr.mxu0 0.0
    %304 = vmatpush1.msra.mxu0 0.0
    %305 = vmatprep.subr.mxu0 0.0
    %306 = vmatpush1.msra.mxu0 0.0
    %307 = vmatprep.subr.mxu0 0.0
    %308 = vmatpush1.msra.mxu0 0.0
    %309 = vmatprep.subr.mxu0 0.0
    %310 = vmatpush1.msra.mxu0 0.0
    %311 = vmatprep.subr.mxu0 0.0
    %312 = vmatpush1.msra.mxu0 0.0
    %313 = vmatprep.subr.mxu0 0.0
    %314 = vmatpush1.msra.mxu0 0.0
    %315 = vmatprep.subr.mxu0 0.0
    %316 = vmatpush1.msra.mxu0 0.0
    %317 = vmatprep.subr.mxu0 0.0
    %318 = vmatpush1.msra.mxu0 0.0
    %319 = vmatprep.subr.mxu0 0.0
    %320 = vmatpush1.msra.mxu0 0.0
    %321 = vmatprep.subr.mxu0 0.0
    %322 = vmatpush1.msra.mxu0 0.0
    %323 = vmatprep.subr.mxu0 0.0
    %324 = vmatpush1.msra.mxu0 0.0
    %325 = vmatprep.subr.mxu0 0.0
    %326 = vmatpush1.msra.mxu0 0.0
    %327 = vmatprep.subr.mxu0 0.0
    %328 = vmatpush1.msra.mxu0 0.0
    %329 = vmatprep.subr.mxu0 0.0
    %330 = vmatpush1.msra.mxu0 0.0
    %331 = vmatprep.subr.mxu0 0.0
    %332 = vmatpush1.msra.mxu0 0.0
    %333 = vmatprep.subr.mxu0 0.0
    %334 = vmatpush1.msra.mxu0 0.0
    %335 = vmatprep.subr.mxu0 0.0
    %336 = vmatpush1.msra.mxu0 0.0
    %337 = vmatprep.subr.mxu0 0.0
    %338 = vmatpush1.msra.mxu0 0.0
    %339 = vmatprep.subr.mxu0 0.0
    %340 = vmatpush1.msra.mxu0 0.0
    %341 = vmatprep.subr.mxu0 0.0
    %342 = vmatpush1.msra.mxu0 0.0
    %343 = vmatprep.subr.mxu0 0.0
    %344 = vmatpush1.msra.mxu0 0.0
    %345 = vmatprep.subr.mxu0 0.0
    %346 = vmatpush1.msra.mxu0 0.0
    %347 = vmatprep.subr.mxu0 0.0
    %348 = vmatpush1.msra.mxu0 0.0
    %349 = vmatprep.subr.mxu0 0.0
    %350 = vmatpush1.msra.mxu0 0.0
    %351 = vmatprep.subr.mxu0 0.0
    %352 = vmatpush1.msra.mxu0 0.0
    %353 = vmatprep.subr.mxu0 0.0
    %354 = vmatpush1.msra.mxu0 0.0
    %355 = vmatprep.subr.mxu0 0.0
    %356 = vmatpush1.msra.mxu0 0.0
    %357 = vmatprep.subr.mxu0 0.0
    %358 = vmatpush1.msra.mxu0 0.0
    %359 = vmatprep.mubr.f32.mxu0 0.0
    %360 = vmatmul.mubr.f32.gmra.mrb[0].mxu0 %v221
    %v361 = vpop.f32.mrb[0].mxu0
    %v362 = vadd.f32 0.0, %v361
    %v363 = vpop.f32.mrb[0].mxu0
    %364 = vdwg.mxu0
    %v366 = vsel %vm219, %v294, 0
    %368 = vmatprep.subr.mxu0 0.0
    %369 = vmatpush1.msra.mxu0 %v109
    %370 = vmatprep.subr.mxu0 0.0
    %371 = vmatpush1.msra.mxu0 %v110
    %372 = vmatprep.subr.mxu0 0.0
    %373 = vmatpush1.msra.mxu0 %v111
    %374 = vmatprep.subr.mxu0 0.0
    %375 = vmatpush1.msra.mxu0 %v112
    %376 = vmatprep.subr.mxu0 0.0
    %377 = vmatpush1.msra.mxu0 0.0
    %378 = vmatprep.subr.mxu0 0.0
    %379 = vmatpush1.msra.mxu0 0.0
    %380 = vmatprep.subr.mxu0 0.0
    %381 = vmatpush1.msra.mxu0 0.0
    %382 = vmatprep.subr.mxu0 0.0
    %383 = vmatpush1.msra.mxu0 0.0
    %384 = vmatprep.subr.mxu0 0.0
    %385 = vmatpush1.msra.mxu0 0.0
    %386 = vmatprep.subr.mxu0 0.0
    %387 = vmatpush1.msra.mxu0 0.0
    %388 = vmatprep.subr.mxu0 0.0
    %389 = vmatpush1.msra.mxu0 0.0
    %390 = vmatprep.subr.mxu0 0.0
    %391 = vmatpush1.msra.mxu0 0.0
    %392 = vmatprep.subr.mxu0 0.0
    %393 = vmatpush1.msra.mxu0 0.0
    %394 = vmatprep.subr.mxu0 0.0
    %395 = vmatpush1.msra.mxu0 0.0
    %396 = vmatprep.subr.mxu0 0.0
    %397 = vmatpush1.msra.mxu0 0.0
    %398 = vmatprep.subr.mxu0 0.0
    %399 = vmatpush1.msra.mxu0 0.0
    %400 = vmatprep.subr.mxu0 0.0
    %401 = vmatpush1.msra.mxu0 0.0
    %402 = vmatprep.subr.mxu0 0.0
    %403 = vmatpush1.msra.mxu0 0.0
    %404 = vmatprep.subr.mxu0 0.0
    %405 = vmatpush1.msra.mxu0 0.0
    %406 = vmatprep.subr.mxu0 0.0
    %407 = vmatpush1.msra.mxu0 0.0
    %408 = vmatprep.subr.mxu0 0.0
    %409 = vmatpush1.msra.mxu0 0.0
    %410 = vmatprep.subr.mxu0 0.0
    %411 = vmatpush1.msra.mxu0 0.0
    %412 = vmatprep.subr.mxu0 0.0
    %413 = vmatpush1.msra.mxu0 0.0
    %414 = vmatprep.subr.mxu0 0.0
    %415 = vmatpush1.msra.mxu0 0.0
    %416 = vmatprep.subr.mxu0 0.0
    %417 = vmatpush1.msra.mxu0 0.0
    %418 = vmatprep.subr.mxu0 0.0
    %419 = vmatpush1.msra.mxu0 0.0
    %420 = vmatprep.subr.mxu0 0.0
    %421 = vmatpush1.msra.mxu0 0.0
    %422 = vmatprep.subr.mxu0 0.0
    %423 = vmatpush1.msra.mxu0 0.0
    %424 = vmatprep.subr.mxu0 0.0
    %425 = vmatpush1.msra.mxu0 0.0
    %426 = vmatprep.subr.mxu0 0.0
    %427 = vmatpush1.msra.mxu0 0.0
    %428 = vmatprep.subr.mxu0 0.0
    %429 = vmatpush1.msra.mxu0 0.0
    %430 = vmatprep.subr.mxu0 0.0
    %431 = vmatpush1.msra.mxu0 0.0
    %432 = vmatprep.mubr.f32.mxu0 0.0
    %433 = vmatmul.mubr.f32.gmra.mrb[0].mxu0 %v366
    %v434 = vpop.f32.mrb[0].mxu0
    %v435 = vadd.f32 %v362, %v434
    %v436 = vpop.f32.mrb[0].mxu0
    %437 = vdwg.mxu0
    %v438 = vadd.f32 %v435, %v126
    %v439 = vtanh.pop %v438
    %440 = vmatprep.subr.mxu0 0.0
    %441 = vmatpush1.msra.mxu0 %v113
    %442 = vmatprep.subr.mxu0 0.0
    %443 = vmatpush1.msra.mxu0 %v114
    %444 = vmatprep.subr.mxu0 0.0
    %445 = vmatpush1.msra.mxu0 %v115
    %446 = vmatprep.subr.mxu0 0.0
    %447 = vmatpush1.msra.mxu0 %v116
    %448 = vmatprep.subr.mxu0 0.0
    %449 = vmatpush1.msra.mxu0 0.0
    %450 = vmatprep.subr.mxu0 0.0
    %451 = vmatpush1.msra.mxu0 0.0
    %452 = vmatprep.subr.mxu0 0.0
    %453 = vmatpush1.msra.mxu0 0.0
    %454 = vmatprep.subr.mxu0 0.0
    %455 = vmatpush1.msra.mxu0 0.0
    %456 = vmatprep.subr.mxu0 0.0
    %457 = vmatpush1.msra.mxu0 0.0
    %458 = vmatprep.subr.mxu0 0.0
    %459 = vmatpush1.msra.mxu0 0.0
    %460 = vmatprep.subr.mxu0 0.0
    %461 = vmatpush1.msra.mxu0 0.0
    %462 = vmatprep.subr.mxu0 0.0
    %463 = vmatpush1.msra.mxu0 0.0
    %464 = vmatprep.subr.mxu0 0.0
    %465 = vmatpush1.msra.mxu0 0.0
    %466 = vmatprep.subr.mxu0 0.0
    %467 = vmatpush1.msra.mxu0 0.0
    %468 = vmatprep.subr.mxu0 0.0
    %469 = vmatpush1.msra.mxu0 0.0
    %470 = vmatprep.subr.mxu0 0.0
    %471 = vmatpush1.msra.mxu0 0.0
    %472 = vmatprep.subr.mxu0 0.0
    %473 = vmatpush1.msra.mxu0 0.0
    %474 = vmatprep.subr.mxu0 0.0
    %475 = vmatpush1.msra.mxu0 0.0
    %476 = vmatprep.subr.mxu0 0.0
    %477 = vmatpush1.msra.mxu0 0.0
    %478 = vmatprep.subr.mxu0 0.0
    %479 = vmatpush1.msra.mxu0 0.0
    %480 = vmatprep.subr.mxu0 0.0
    %481 = vmatpush1.msra.mxu0 0.0
    %482 = vmatprep.subr.mxu0 0.0
    %483 = vmatpush1.msra.mxu0 0.0
    %484 = vmatprep.subr.mxu0 0.0
    %485 = vmatpush1.msra.mxu0 0.0
    %486 = vmatprep.subr.mxu0 0.0
    %487 = vmatpush1.msra.mxu0 0.0
    %488 = vmatprep.subr.mxu0 0.0
    %489 = vmatpush1.msra.mxu0 0.0
    %490 = vmatprep.subr.mxu0 0.0
    %491 = vmatpush1.msra.mxu0 0.0
    %492 = vmatprep.subr.mxu0 0.0
    %493 = vmatpush1.msra.mxu0 0.0
    %494 = vmatprep.subr.mxu0 0.0
    %495 = vmatpush1.msra.mxu0 0.0
    %496 = vmatprep.subr.mxu0 0.0
    %497 = vmatpush1.msra.mxu0 0.0
    %498 = vmatprep.subr.mxu0 0.0
    %499 = vmatpush1.msra.mxu0 0.0
    %500 = vmatprep.subr.mxu0 0.0
    %501 = vmatpush1.msra.mxu0 0.0
    %502 = vmatprep.subr.mxu0 0.0
    %503 = vmatpush1.msra.mxu0 0.0
    %504 = vmatprep.mubr.f32.mxu0 0.0
    %505 = vmatmul.mubr.f32.gmra.mrb[0].mxu0 %v366
    %v506 = vpop.f32.mrb[0].mxu0
    %v507 = vadd.f32 0.0, %v506
    %v508 = vpop.f32.mrb[0].mxu0
    %509 = vdwg.mxu0
    %v511 = vrot.slane %v507, 6
    %v513 = vadd.f32 %v211, %v511
    %v514 = vtanh.pop %v513
    %v516 = vsel %vm219, %v439, 0
    %518 = vmatprep.subr.mxu0 0.0
    %519 = vmatpush1.msra.mxu0 %v117
    %520 = vmatprep.subr.mxu0 0.0
    %521 = vmatpush1.msra.mxu0 %v118
    %522 = vmatprep.subr.mxu0 0.0
    %523 = vmatpush1.msra.mxu0 %v119
    %524 = vmatprep.subr.mxu0 0.0
    %525 = vmatpush1.msra.mxu0 %v120
    %526 = vmatprep.subr.mxu0 0.0
    %527 = vmatpush1.msra.mxu0 0.0
    %528 = vmatprep.subr.mxu0 0.0
    %529 = vmatpush1.msra.mxu0 0.0
    %530 = vmatprep.subr.mxu0 0.0
    %531 = vmatpush1.msra.mxu0 0.0
    %532 = vmatprep.subr.mxu0 0.0
    %533 = vmatpush1.msra.mxu0 0.0
    %534 = vmatprep.subr.mxu0 0.0
    %535 = vmatpush1.msra.mxu0 0.0
    %536 = vmatprep.subr.mxu0 0.0
    %537 = vmatpush1.msra.mxu0 0.0
    %538 = vmatprep.subr.mxu0 0.0
    %539 = vmatpush1.msra.mxu0 0.0
    %540 = vmatprep.subr.mxu0 0.0
    %541 = vmatpush1.msra.mxu0 0.0
    %542 = vmatprep.subr.mxu0 0.0
    %543 = vmatpush1.msra.mxu0 0.0
    %544 = vmatprep.subr.mxu0 0.0
    %545 = vmatpush1.msra.mxu0 0.0
    %546 = vmatprep.subr.mxu0 0.0
    %547 = vmatpush1.msra.mxu0 0.0
    %548 = vmatprep.subr.mxu0 0.0
    %549 = vmatpush1.msra.mxu0 0.0
    %550 = vmatprep.subr.mxu0 0.0
    %551 = vmatpush1.msra.mxu0 0.0
    %552 = vmatprep.subr.mxu0 0.0
    %553 = vmatpush1.msra.mxu0 0.0
    %554 = vmatprep.subr.mxu0 0.0
    %555 = vmatpush1.msra.mxu0 0.0
    %556 = vmatprep.subr.mxu0 0.0
    %557 = vmatpush1.msra.mxu0 0.0
    %558 = vmatprep.subr.mxu0 0.0
    %559 = vmatpush1.msra.mxu0 0.0
    %560 = vmatprep.subr.mxu0 0.0
    %561 = vmatpush1.msra.mxu0 0.0
    %562 = vmatprep.subr.mxu0 0.0
    %563 = vmatpush1.msra.mxu0 0.0
    %564 = vmatprep.subr.mxu0 0.0
    %565 = vmatpush1.msra.mxu0 0.0
    %566 = vmatprep.subr.mxu0 0.0
    %567 = vmatpush1.msra.mxu0 0.0
    %568 = vmatprep.subr.mxu0 0.0
    %569 = vmatpush1.msra.mxu0 0.0
    %570 = vmatprep.subr.mxu0 0.0
    %571 = vmatpush1.msra.mxu0 0.0
    %572 = vmatprep.subr.mxu0 0.0
    %573 = vmatpush1.msra.mxu0 0.0
    %574 = vmatprep.subr.mxu0 0.0
    %575 = vmatpush1.msra.mxu0 0.0
    %576 = vmatprep.subr.mxu0 0.0
    %577 = vmatpush1.msra.mxu0 0.0
    %578 = vmatprep.subr.mxu0 0.0
    %579 = vmatpush1.msra.mxu0 0.0
    %580 = vmatprep.subr.mxu0 0.0
    %581 = vmatpush1.msra.mxu0 0.0
    %582 = vmatprep.mubr.f32.mxu0 0.0
    %583 = vmatmul.mubr.f32.gmra.mrb[0].mxu0 %v516
    %v584 = vpop.f32.mrb[0].mxu0
    %v585 = vadd.f32 0.0, %v584
    %v586 = vpop.f32.mrb[0].mxu0
    %587 = vdwg.mxu0
    %v589 = vrot.slane %v514, 2
    %v590 = vsel %vm219, %v589, 0
    %592 = vmatprep.subr.mxu0 0.0
    %593 = vmatpush1.msra.mxu0 %v109
    %594 = vmatprep.subr.mxu0 0.0
    %595 = vmatpush1.msra.mxu0 %v110
    %596 = vmatprep.subr.mxu0 0.0
    %597 = vmatpush1.msra.mxu0 %v111
    %598 = vmatprep.subr.mxu0 0.0
    %599 = vmatpush1.msra.mxu0 %v112
    %600 = vmatprep.subr.mxu0 0.0
    %601 = vmatpush1.msra.mxu0 0.0
    %602 = vmatprep.subr.mxu0 0.0
    %603 = vmatpush1.msra.mxu0 0.0
    %604 = vmatprep.subr.mxu0 0.0
    %605 = vmatpush1.msra.mxu0 0.0
    %606 = vmatprep.subr.mxu0 0.0
    %607 = vmatpush1.msra.mxu0 0.0
    %608 = vmatprep.subr.mxu0 0.0
    %609 = vmatpush1.msra.mxu0 0.0
    %610 = vmatprep.subr.mxu0 0.0
    %611 = vmatpush1.msra.mxu0 0.0
    %612 = vmatprep.subr.mxu0 0.0
    %613 = vmatpush1.msra.mxu0 0.0
    %614 = vmatprep.subr.mxu0 0.0
    %615 = vmatpush1.msra.mxu0 0.0
    %616 = vmatprep.subr.mxu0 0.0
    %617 = vmatpush1.msra.mxu0 0.0
    %618 = vmatprep.subr.mxu0 0.0
    %619 = vmatpush1.msra.mxu0 0.0
    %620 = vmatprep.subr.mxu0 0.0
    %621 = vmatpush1.msra.mxu0 0.0
    %622 = vmatprep.subr.mxu0 0.0
    %623 = vmatpush1.msra.mxu0 0.0
    %624 = vmatprep.subr.mxu0 0.0
    %625 = vmatpush1.msra.mxu0 0.0
    %626 = vmatprep.subr.mxu0 0.0
    %627 = vmatpush1.msra.mxu0 0.0
    %628 = vmatprep.subr.mxu0 0.0
    %629 = vmatpush1.msra.mxu0 0.0
    %630 = vmatprep.subr.mxu0 0.0
    %631 = vmatpush1.msra.mxu0 0.0
    %632 = vmatprep.subr.mxu0 0.0
    %633 = vmatpush1.msra.mxu0 0.0
    %634 = vmatprep.subr.mxu0 0.0
    %635 = vmatpush1.msra.mxu0 0.0
    %636 = vmatprep.subr.mxu0 0.0
    %637 = vmatpush1.msra.mxu0 0.0
    %638 = vmatprep.subr.mxu0 0.0
    %639 = vmatpush1.msra.mxu0 0.0
    %640 = vmatprep.subr.mxu0 0.0
    %641 = vmatpush1.msra.mxu0 0.0
    %642 = vmatprep.subr.mxu0 0.0
    %643 = vmatpush1.msra.mxu0 0.0
    %644 = vmatprep.subr.mxu0 0.0
    %645 = vmatpush1.msra.mxu0 0.0
    %646 = vmatprep.subr.mxu0 0.0
    %647 = vmatpush1.msra.mxu0 0.0
    %648 = vmatprep.subr.mxu0 0.0
    %649 = vmatpush1.msra.mxu0 0.0
    %650 = vmatprep.subr.mxu0 0.0
    %651 = vmatpush1.msra.mxu0 0.0
    %652 = vmatprep.subr.mxu0 0.0
    %653 = vmatpush1.msra.mxu0 0.0
    %654 = vmatprep.subr.mxu0 0.0
    %655 = vmatpush1.msra.mxu0 0.0
    %656 = vmatprep.mubr.f32.mxu0 0.0
    %657 = vmatmul.mubr.f32.gmra.mrb[0].mxu0 %v590
    %v658 = vpop.f32.mrb[0].mxu0
    %v659 = vadd.f32 %v585, %v658
    %v660 = vpop.f32.mrb[0].mxu0
    %661 = vdwg.mxu0
    %v662 = vadd.f32 %v659, %v126
    %v663 = vtanh.pop %v662
    %664 = vmatprep.subr.mxu0 0.0
    %665 = vmatpush1.msra.mxu0 %v113
    %666 = vmatprep.subr.mxu0 0.0
    %667 = vmatpush1.msra.mxu0 %v114
    %668 = vmatprep.subr.mxu0 0.0
    %669 = vmatpush1.msra.mxu0 %v115
    %670 = vmatprep.subr.mxu0 0.0
    %671 = vmatpush1.msra.mxu0 %v116
    %672 = vmatprep.subr.mxu0 0.0
    %673 = vmatpush1.msra.mxu0 0.0
    %674 = vmatprep.subr.mxu0 0.0
    %675 = vmatpush1.msra.mxu0 0.0
    %676 = vmatprep.subr.mxu0 0.0
    %677 = vmatpush1.msra.mxu0 0.0
    %678 = vmatprep.subr.mxu0 0.0
    %679 = vmatpush1.msra.mxu0 0.0
    %680 = vmatprep.subr.mxu0 0.0
    %681 = vmatpush1.msra.mxu0 0.0
    %682 = vmatprep.subr.mxu0 0.0
    %683 = vmatpush1.msra.mxu0 0.0
    %684 = vmatprep.subr.mxu0 0.0
    %685 = vmatpush1.msra.mxu0 0.0
    %686 = vmatprep.subr.mxu0 0.0
    %687 = vmatpush1.msra.mxu0 0.0
    %688 = vmatprep.subr.mxu0 0.0
    %689 = vmatpush1.msra.mxu0 0.0
    %690 = vmatprep.subr.mxu0 0.0
    %691 = vmatpush1.msra.mxu0 0.0
    %692 = vmatprep.subr.mxu0 0.0
    %693 = vmatpush1.msra.mxu0 0.0
    %694 = vmatprep.subr.mxu0 0.0
    %695 = vmatpush1.msra.mxu0 0.0
    %696 = vmatprep.subr.mxu0 0.0
    %697 = vmatpush1.msra.mxu0 0.0
    %698 = vmatprep.subr.mxu0 0.0
    %699 = vmatpush1.msra.mxu0 0.0
    %700 = vmatprep.subr.mxu0 0.0
    %701 = vmatpush1.msra.mxu0 0.0
    %702 = vmatprep.subr.mxu0 0.0
    %703 = vmatpush1.msra.mxu0 0.0
    %704 = vmatprep.subr.mxu0 0.0
    %705 = vmatpush1.msra.mxu0 0.0
    %706 = vmatprep.subr.mxu0 0.0
    %707 = vmatpush1.msra.mxu0 0.0
    %708 = vmatprep.subr.mxu0 0.0
    %709 = vmatpush1.msra.mxu0 0.0
    %710 = vmatprep.subr.mxu0 0.0
    %711 = vmatpush1.msra.mxu0 0.0
    %712 = vmatprep.subr.mxu0 0.0
    %713 = vmatpush1.msra.mxu0 0.0
    %714 = vmatprep.subr.mxu0 0.0
    %715 = vmatpush1.msra.mxu0 0.0
    %716 = vmatprep.subr.mxu0 0.0
    %717 = vmatpush1.msra.mxu0 0.0
    %718 = vmatprep.subr.mxu0 0.0
    %719 = vmatpush1.msra.mxu0 0.0
    %720 = vmatprep.subr.mxu0 0.0
    %721 = vmatpush1.msra.mxu0 0.0
    %722 = vmatprep.subr.mxu0 0.0
    %723 = vmatpush1.msra.mxu0 0.0
    %724 = vmatprep.subr.mxu0 0.0
    %725 = vmatpush1.msra.mxu0 0.0
    %726 = vmatprep.subr.mxu0 0.0
    %727 = vmatpush1.msra.mxu0 0.0
    %728 = vmatprep.mubr.f32.mxu0 0.0
    %729 = vmatmul.mubr.f32.gmra.mrb[0].mxu0 %v590
    %v730 = vpop.f32.mrb[0].mxu0
    %v731 = vadd.f32 0.0, %v730
    %v732 = vpop.f32.mrb[0].mxu0
    %733 = vdwg.mxu0
    %v735 = vrot.slane %v731, 4
    %v737 = vadd.f32 %v211, %v735
    %v738 = vtanh.pop %v737
    %v740 = vsel %vm219, %v663, 0
    %742 = vmatprep.subr.mxu0 0.0
    %743 = vmatpush1.msra.mxu0 %v117
    %744 = vmatprep.subr.mxu0 0.0
    %745 = vmatpush1.msra.mxu0 %v118
    %746 = vmatprep.subr.mxu0 0.0
    %747 = vmatpush1.msra.mxu0 %v119
    %748 = vmatprep.subr.mxu0 0.0
    %749 = vmatpush1.msra.mxu0 %v120
    %750 = vmatprep.subr.mxu0 0.0
    %751 = vmatpush1.msra.mxu0 0.0
    %752 = vmatprep.subr.mxu0 0.0
    %753 = vmatpush1.msra.mxu0 0.0
    %754 = vmatprep.subr.mxu0 0.0
    %755 = vmatpush1.msra.mxu0 0.0
    %756 = vmatprep.subr.mxu0 0.0
    %757 = vmatpush1.msra.mxu0 0.0
    %758 = vmatprep.subr.mxu0 0.0
    %759 = vmatpush1.msra.mxu0 0.0
    %760 = vmatprep.subr.mxu0 0.0
    %761 = vmatpush1.msra.mxu0 0.0
    %762 = vmatprep.subr.mxu0 0.0
    %763 = vmatpush1.msra.mxu0 0.0
    %764 = vmatprep.subr.mxu0 0.0
    %765 = vmatpush1.msra.mxu0 0.0
    %766 = vmatprep.subr.mxu0 0.0
    %767 = vmatpush1.msra.mxu0 0.0
    %768 = vmatprep.subr.mxu0 0.0
    %769 = vmatpush1.msra.mxu0 0.0
    %770 = vmatprep.subr.mxu0 0.0
    %771 = vmatpush1.msra.mxu0 0.0
    %772 = vmatprep.subr.mxu0 0.0
    %773 = vmatpush1.msra.mxu0 0.0
    %774 = vmatprep.subr.mxu0 0.0
    %775 = vmatpush1.msra.mxu0 0.0
    %776 = vmatprep.subr.mxu0 0.0
    %777 = vmatpush1.msra.mxu0 0.0
    %778 = vmatprep.subr.mxu0 0.0
    %779 = vmatpush1.msra.mxu0 0.0
    %780 = vmatprep.subr.mxu0 0.0
    %781 = vmatpush1.msra.mxu0 0.0
    %782 = vmatprep.subr.mxu0 0.0
    %783 = vmatpush1.msra.mxu0 0.0
    %784 = vmatprep.subr.mxu0 0.0
    %785 = vmatpush1.msra.mxu0 0.0
    %786 = vmatprep.subr.mxu0 0.0
    %787 = vmatpush1.msra.mxu0 0.0
    %788 = vmatprep.subr.mxu0 0.0
    %789 = vmatpush1.msra.mxu0 0.0
    %790 = vmatprep.subr.mxu0 0.0
    %791 = vmatpush1.msra.mxu0 0.0
    %792 = vmatprep.subr.mxu0 0.0
    %793 = vmatpush1.msra.mxu0 0.0
    %794 = vmatprep.subr.mxu0 0.0
    %795 = vmatpush1.msra.mxu0 0.0
    %796 = vmatprep.subr.mxu0 0.0
    %797 = vmatpush1.msra.mxu0 0.0
    %798 = vmatprep.subr.mxu0 0.0
    %799 = vmatpush1.msra.mxu0 0.0
    %800 = vmatprep.subr.mxu0 0.0
    %801 = vmatpush1.msra.mxu0 0.0
    %802 = vmatprep.subr.mxu0 0.0
    %803 = vmatpush1.msra.mxu0 0.0
    %804 = vmatprep.subr.mxu0 0.0
    %805 = vmatpush1.msra.mxu0 0.0
    %806 = vmatprep.mubr.f32.mxu0 0.0
    %807 = vmatmul.mubr.f32.gmra.mrb[0].mxu0 %v740
    %v808 = vpop.f32.mrb[0].mxu0
    %v809 = vadd.f32 0.0, %v808
    %v810 = vpop.f32.mrb[0].mxu0
    %811 = vdwg.mxu0
    %v813 = vrot.slane %v738, 4
    %v814 = vsel %vm219, %v813, 0
    %816 = vmatprep.subr.mxu0 0.0
    %817 = vmatpush1.msra.mxu0 %v109
    %818 = vmatprep.subr.mxu0 0.0
    %819 = vmatpush1.msra.mxu0 %v110
    %820 = vmatprep.subr.mxu0 0.0
    %821 = vmatpush1.msra.mxu0 %v111
    %822 = vmatprep.subr.mxu0 0.0
    %823 = vmatpush1.msra.mxu0 %v112
    %824 = vmatprep.subr.mxu0 0.0
    %825 = vmatpush1.msra.mxu0 0.0
    %826 = vmatprep.subr.mxu0 0.0
    %827 = vmatpush1.msra.mxu0 0.0
    %828 = vmatprep.subr.mxu0 0.0
    %829 = vmatpush1.msra.mxu0 0.0
    %830 = vmatprep.subr.mxu0 0.0
    %831 = vmatpush1.msra.mxu0 0.0
    %832 = vmatprep.subr.mxu0 0.0
    %833 = vmatpush1.msra.mxu0 0.0
    %834 = vmatprep.subr.mxu0 0.0
    %835 = vmatpush1.msra.mxu0 0.0
    %836 = vmatprep.subr.mxu0 0.0
    %837 = vmatpush1.msra.mxu0 0.0
    %838 = vmatprep.subr.mxu0 0.0
    %839 = vmatpush1.msra.mxu0 0.0
    %840 = vmatprep.subr.mxu0 0.0
    %841 = vmatpush1.msra.mxu0 0.0
    %842 = vmatprep.subr.mxu0 0.0
    %843 = vmatpush1.msra.mxu0 0.0
    %844 = vmatprep.subr.mxu0 0.0
    %845 = vmatpush1.msra.mxu0 0.0
    %846 = vmatprep.subr.mxu0 0.0
    %847 = vmatpush1.msra.mxu0 0.0
    %848 = vmatprep.subr.mxu0 0.0
    %849 = vmatpush1.msra.mxu0 0.0
    %850 = vmatprep.subr.mxu0 0.0
    %851 = vmatpush1.msra.mxu0 0.0
    %852 = vmatprep.subr.mxu0 0.0
    %853 = vmatpush1.msra.mxu0 0.0
    %854 = vmatprep.subr.mxu0 0.0
    %855 = vmatpush1.msra.mxu0 0.0
    %856 = vmatprep.subr.mxu0 0.0
    %857 = vmatpush1.msra.mxu0 0.0
    %858 = vmatprep.subr.mxu0 0.0
    %859 = vmatpush1.msra.mxu0 0.0
    %860 = vmatprep.subr.mxu0 0.0
    %861 = vmatpush1.msra.mxu0 0.0
    %862 = vmatprep.subr.mxu0 0.0
    %863 = vmatpush1.msra.mxu0 0.0
    %864 = vmatprep.subr.mxu0 0.0
    %865 = vmatpush1.msra.mxu0 0.0
    %866 = vmatprep.subr.mxu0 0.0
    %867 = vmatpush1.msra.mxu0 0.0
    %868 = vmatprep.subr.mxu0 0.0
    %869 = vmatpush1.msra.mxu0 0.0
    %870 = vmatprep.subr.mxu0 0.0
    %871 = vmatpush1.msra.mxu0 0.0
    %872 = vmatprep.subr.mxu0 0.0
    %873 = vmatpush1.msra.mxu0 0.0
    %874 = vmatprep.subr.mxu0 0.0
    %875 = vmatpush1.msra.mxu0 0.0
    %876 = vmatprep.subr.mxu0 0.0
    %877 = vmatpush1.msra.mxu0 0.0
    %878 = vmatprep.subr.mxu0 0.0
    %879 = vmatpush1.msra.mxu0 0.0
    %880 = vmatprep.mubr.f32.mxu0 0.0
    %881 = vmatmul.mubr.f32.gmra.mrb[0].mxu0 %v814
    %v882 = vpop.f32.mrb[0].mxu0
    %v883 = vadd.f32 %v809, %v882
    %v884 = vpop.f32.mrb[0].mxu0
    %885 = vdwg.mxu0
    %v886 = vadd.f32 %v883, %v126
    %v887 = vtanh.pop %v886
    %888 = vmatprep.subr.mxu0 0.0
    %889 = vmatpush1.msra.mxu0 %v113
    %890 = vmatprep.subr.mxu0 0.0
    %891 = vmatpush1.msra.mxu0 %v114
    %892 = vmatprep.subr.mxu0 0.0
    %893 = vmatpush1.msra.mxu0 %v115
    %894 = vmatprep.subr.mxu0 0.0
    %895 = vmatpush1.msra.mxu0 %v116
    %896 = vmatprep.subr.mxu0 0.0
    %897 = vmatpush1.msra.mxu0 0.0
    %898 = vmatprep.subr.mxu0 0.0
    %899 = vmatpush1.msra.mxu0 0.0
    %900 = vmatprep.subr.mxu0 0.0
    %901 = vmatpush1.msra.mxu0 0.0
    %902 = vmatprep.subr.mxu0 0.0
    %903 = vmatpush1.msra.mxu0 0.0
    %904 = vmatprep.subr.mxu0 0.0
    %905 = vmatpush1.msra.mxu0 0.0
    %906 = vmatprep.subr.mxu0 0.0
    %907 = vmatpush1.msra.mxu0 0.0
    %908 = vmatprep.subr.mxu0 0.0
    %909 = vmatpush1.msra.mxu0 0.0
    %910 = vmatprep.subr.mxu0 0.0
    %911 = vmatpush1.msra.mxu0 0.0
    %912 = vmatprep.subr.mxu0 0.0
    %913 = vmatpush1.msra.mxu0 0.0
    %914 = vmatprep.subr.mxu0 0.0
    %915 = vmatpush1.msra.mxu0 0.0
    %916 = vmatprep.subr.mxu0 0.0
    %917 = vmatpush1.msra.mxu0 0.0
    %918 = vmatprep.subr.mxu0 0.0
    %919 = vmatpush1.msra.mxu0 0.0
    %920 = vmatprep.subr.mxu0 0.0
    %921 = vmatpush1.msra.mxu0 0.0
    %922 = vmatprep.subr.mxu0 0.0
    %923 = vmatpush1.msra.mxu0 0.0
    %924 = vmatprep.subr.mxu0 0.0
    %925 = vmatpush1.msra.mxu0 0.0
    %926 = vmatprep.subr.mxu0 0.0
    %927 = vmatpush1.msra.mxu0 0.0
    %928 = vmatprep.subr.mxu0 0.0
    %929 = vmatpush1.msra.mxu0 0.0
    %930 = vmatprep.subr.mxu0 0.0
    %931 = vmatpush1.msra.mxu0 0.0
    %932 = vmatprep.subr.mxu0 0.0
    %933 = vmatpush1.msra.mxu0 0.0
    %934 = vmatprep.subr.mxu0 0.0
    %935 = vmatpush1.msra.mxu0 0.0
    %936 = vmatprep.subr.mxu0 0.0
    %937 = vmatpush1.msra.mxu0 0.0
    %938 = vmatprep.subr.mxu0 0.0
    %939 = vmatpush1.msra.mxu0 0.0
    %940 = vmatprep.subr.mxu0 0.0
    %941 = vmatpush1.msra.mxu0 0.0
    %942 = vmatprep.subr.mxu0 0.0
    %943 = vmatpush1.msra.mxu0 0.0
    %944 = vmatprep.subr.mxu0 0.0
    %945 = vmatpush1.msra.mxu0 0.0
    %946 = vmatprep.subr.mxu0 0.0
    %947 = vmatpush1.msra.mxu0 0.0
    %948 = vmatprep.subr.mxu0 0.0
    %949 = vmatpush1.msra.mxu0 0.0
    %950 = vmatprep.subr.mxu0 0.0
    %951 = vmatpush1.msra.mxu0 0.0
    %952 = vmatprep.mubr.f32.mxu0 0.0
    %953 = vmatmul.mubr.f32.gmra.mrb[0].mxu0 %v814
    %v954 = vpop.f32.mrb[0].mxu0
    %v955 = vadd.f32 0.0, %v954
    %v956 = vpop.f32.mrb[0].mxu0
    %957 = vdwg.mxu0
    %v959 = vrot.slane %v955, 2
    %v961 = vadd.f32 %v211, %v959
    %v962 = vtanh.pop %v961
    %v964 = vsel %vm219, %v887, 0
    %966 = vmatprep.subr.mxu0 0.0
    %967 = vmatpush1.msra.mxu0 %v117
    %968 = vmatprep.subr.mxu0 0.0
    %969 = vmatpush1.msra.mxu0 %v118
    %970 = vmatprep.subr.mxu0 0.0
    %971 = vmatpush1.msra.mxu0 %v119
    %972 = vmatprep.subr.mxu0 0.0
    %973 = vmatpush1.msra.mxu0 %v120
    %974 = vmatprep.subr.mxu0 0.0
    %975 = vmatpush1.msra.mxu0 0.0
    %976 = vmatprep.subr.mxu0 0.0
    %977 = vmatpush1.msra.mxu0 0.0
    %978 = vmatprep.subr.mxu0 0.0
    %979 = vmatpush1.msra.mxu0 0.0
    %980 = vmatprep.subr.mxu0 0.0
    %981 = vmatpush1.msra.mxu0 0.0
    %982 = vmatprep.subr.mxu0 0.0
    %983 = vmatpush1.msra.mxu0 0.0
    %984 = vmatprep.subr.mxu0 0.0
    %985 = vmatpush1.msra.mxu0 0.0
    %986 = vmatprep.subr.mxu0 0.0
    %987 = vmatpush1.msra.mxu0 0.0
    %988 = vmatprep.subr.mxu0 0.0
    %989 = vmatpush1.msra.mxu0 0.0
    %990 = vmatprep.subr.mxu0 0.0
    %991 = vmatpush1.msra.mxu0 0.0
    %992 = vmatprep.subr.mxu0 0.0
    %993 = vmatpush1.msra.mxu0 0.0
    %994 = vmatprep.subr.mxu0 0.0
    %995 = vmatpush1.msra.mxu0 0.0
    %996 = vmatprep.subr.mxu0 0.0
    %997 = vmatpush1.msra.mxu0 0.0
    %998 = vmatprep.subr.mxu0 0.0
    %999 = vmatpush1.msra.mxu0 0.0
    %1000 = vmatprep.subr.mxu0 0.0
    %1001 = vmatpush1.msra.mxu0 0.0
    %1002 = vmatprep.subr.mxu0 0.0
    %1003 = vmatpush1.msra.mxu0 0.0
    %1004 = vmatprep.subr.mxu0 0.0
    %1005 = vmatpush1.msra.mxu0 0.0
    %1006 = vmatprep.subr.mxu0 0.0
    %1007 = vmatpush1.msra.mxu0 0.0
    %1008 = vmatprep.subr.mxu0 0.0
    %1009 = vmatpush1.msra.mxu0 0.0
    %1010 = vmatprep.subr.mxu0 0.0
    %1011 = vmatpush1.msra.mxu0 0.0
    %1012 = vmatprep.subr.mxu0 0.0
    %1013 = vmatpush1.msra.mxu0 0.0
    %1014 = vmatprep.subr.mxu0 0.0
    %1015 = vmatpush1.msra.mxu0 0.0
    %1016 = vmatprep.subr.mxu0 0.0
    %1017 = vmatpush1.msra.mxu0 0.0
    %1018 = vmatprep.subr.mxu0 0.0
    %1019 = vmatpush1.msra.mxu0 0.0
    %1020 = vmatprep.subr.mxu0 0.0
    %1021 = vmatpush1.msra.mxu0 0.0
    %1022 = vmatprep.subr.mxu0 0.0
    %1023 = vmatpush1.msra.mxu0 0.0
    %1024 = vmatprep.subr.mxu0 0.0
    %1025 = vmatpush1.msra.mxu0 0.0
    %1026 = vmatprep.subr.mxu0 0.0
    %1027 = vmatpush1.msra.mxu0 0.0
    %1028 = vmatprep.subr.mxu0 0.0
    %1029 = vmatpush1.msra.mxu0 0.0
    %1030 = vmatprep.mubr.f32.mxu0 0.0
    %1031 = vmatmul.mubr.f32.gmra.mrb[0].mxu0 %v964
    %v1032 = vpop.f32.mrb[0].mxu0
    %v1033 = vadd.f32 0.0, %v1032
    %v1034 = vpop.f32.mrb[0].mxu0
    %1035 = vdwg.mxu0
    %v1037 = vrot.slane %v962, 6
    %v1038 = vsel %vm219, %v1037, 0
    %1040 = vmatprep.subr.mxu0 0.0
    %1041 = vmatpush1.msra.mxu0 %v109
    %1042 = vmatprep.subr.mxu0 0.0
    %1043 = vmatpush1.msra.mxu0 %v110
    %1044 = vmatprep.subr.mxu0 0.0
    %1045 = vmatpush1.msra.mxu0 %v111
    %1046 = vmatprep.subr.mxu0 0.0
    %1047 = vmatpush1.msra.mxu0 %v112
    %1048 = vmatprep.subr.mxu0 0.0
    %1049 = vmatpush1.msra.mxu0 0.0
    %1050 = vmatprep.subr.mxu0 0.0
    %1051 = vmatpush1.msra.mxu0 0.0
    %1052 = vmatprep.subr.mxu0 0.0
    %1053 = vmatpush1.msra.mxu0 0.0
    %1054 = vmatprep.subr.mxu0 0.0
    %1055 = vmatpush1.msra.mxu0 0.0
    %1056 = vmatprep.subr.mxu0 0.0
    %1057 = vmatpush1.msra.mxu0 0.0
    %1058 = vmatprep.subr.mxu0 0.0
    %1059 = vmatpush1.msra.mxu0 0.0
    %1060 = vmatprep.subr.mxu0 0.0
    %1061 = vmatpush1.msra.mxu0 0.0
    %1062 = vmatprep.subr.mxu0 0.0
    %1063 = vmatpush1.msra.mxu0 0.0
    %1064 = vmatprep.subr.mxu0 0.0
    %1065 = vmatpush1.msra.mxu0 0.0
    %1066 = vmatprep.subr.mxu0 0.0
    %1067 = vmatpush1.msra.mxu0 0.0
    %1068 = vmatprep.subr.mxu0 0.0
    %1069 = vmatpush1.msra.mxu0 0.0
    %1070 = vmatprep.subr.mxu0 0.0
    %1071 = vmatpush1.msra.mxu0 0.0
    %1072 = vmatprep.subr.mxu0 0.0
    %1073 = vmatpush1.msra.mxu0 0.0
    %1074 = vmatprep.subr.mxu0 0.0
    %1075 = vmatpush1.msra.mxu0 0.0
    %1076 = vmatprep.subr.mxu0 0.0
    %1077 = vmatpush1.msra.mxu0 0.0
    %1078 = vmatprep.subr.mxu0 0.0
    %1079 = vmatpush1.msra.mxu0 0.0
    %1080 = vmatprep.subr.mxu0 0.0
    %1081 = vmatpush1.msra.mxu0 0.0
    %1082 = vmatprep.subr.mxu0 0.0
    %1083 = vmatpush1.msra.mxu0 0.0
    %1084 = vmatprep.subr.mxu0 0.0
    %1085 = vmatpush1.msra.mxu0 0.0
    %1086 = vmatprep.subr.mxu0 0.0
    %1087 = vmatpush1.msra.mxu0 0.0
    %1088 = vmatprep.subr.mxu0 0.0
    %1089 = vmatpush1.msra.mxu0 0.0
    %1090 = vmatprep.subr.mxu0 0.0
    %1091 = vmatpush1.msra.mxu0 0.0
    %1092 = vmatprep.subr.mxu0 0.0
    %1093 = vmatpush1.msra.mxu0 0.0
    %1094 = vmatprep.subr.mxu0 0.0
    %1095 = vmatpush1.msra.mxu0 0.0
    %1096 = vmatprep.subr.mxu0 0.0
    %1097 = vmatpush1.msra.mxu0 0.0
    %1098 = vmatprep.subr.mxu0 0.0
    %1099 = vmatpush1.msra.mxu0 0.0
    %1100 = vmatprep.subr.mxu0 0.0
    %1101 = vmatpush1.msra.mxu0 0.0
    %1102 = vmatprep.subr.mxu0 0.0
    %1103 = vmatpush1.msra.mxu0 0.0
    %1104 = vmatprep.mubr.f32.mxu0 0.0
    %1105 = vmatmul.mubr.f32.gmra.mrb[0].mxu0 %v1038
    %v1106 = vpop.f32.mrb[0].mxu0
    %v1107 = vadd.f32 %v1033, %v1106
    %v1108 = vpop.f32.mrb[0].mxu0
    %1109 = vdwg.mxu0
    %v1110 = vadd.f32 %v1107, %v126
    %v1111 = vtanh.pop %v1110
    %1112 = vmatprep.subr.mxu0 0.0
    %1113 = vmatpush1.msra.mxu0 %v113
    %1114 = vmatprep.subr.mxu0 0.0
    %1115 = vmatpush1.msra.mxu0 %v114
    %1116 = vmatprep.subr.mxu0 0.0
    %1117 = vmatpush1.msra.mxu0 %v115
    %1118 = vmatprep.subr.mxu0 0.0
    %1119 = vmatpush1.msra.mxu0 %v116
    %1120 = vmatprep.subr.mxu0 0.0
    %1121 = vmatpush1.msra.mxu0 0.0
    %1122 = vmatprep.subr.mxu0 0.0
    %1123 = vmatpush1.msra.mxu0 0.0
    %1124 = vmatprep.subr.mxu0 0.0
    %1125 = vmatpush1.msra.mxu0 0.0
    %1126 = vmatprep.subr.mxu0 0.0
    %1127 = vmatpush1.msra.mxu0 0.0
    %1128 = vmatprep.subr.mxu0 0.0
    %1129 = vmatpush1.msra.mxu0 0.0
    %1130 = vmatprep.subr.mxu0 0.0
    %1131 = vmatpush1.msra.mxu0 0.0
    %1132 = vmatprep.subr.mxu0 0.0
    %1133 = vmatpush1.msra.mxu0 0.0
    %1134 = vmatprep.subr.mxu0 0.0
    %1135 = vmatpush1.msra.mxu0 0.0
    %1136 = vmatprep.subr.mxu0 0.0
    %1137 = vmatpush1.msra.mxu0 0.0
    %1138 = vmatprep.subr.mxu0 0.0
    %1139 = vmatpush1.msra.mxu0 0.0
    %1140 = vmatprep.subr.mxu0 0.0
    %1141 = vmatpush1.msra.mxu0 0.0
    %1142 = vmatprep.subr.mxu0 0.0
    %1143 = vmatpush1.msra.mxu0 0.0
    %1144 = vmatprep.subr.mxu0 0.0
    %1145 = vmatpush1.msra.mxu0 0.0
    %1146 = vmatprep.subr.mxu0 0.0
    %1147 = vmatpush1.msra.mxu0 0.0
    %1148 = vmatprep.subr.mxu0 0.0
    %1149 = vmatpush1.msra.mxu0 0.0
    %1150 = vmatprep.subr.mxu0 0.0
    %1151 = vmatpush1.msra.mxu0 0.0
    %1152 = vmatprep.subr.mxu0 0.0
    %1153 = vmatpush1.msra.mxu0 0.0
    %1154 = vmatprep.subr.mxu0 0.0
    %1155 = vmatpush1.msra.mxu0 0.0
    %1156 = vmatprep.subr.mxu0 0.0
    %1157 = vmatpush1.msra.mxu0 0.0
    %1158 = vmatprep.subr.mxu0 0.0
    %1159 = vmatpush1.msra.mxu0 0.0
    %1160 = vmatprep.subr.mxu0 0.0
    %1161 = vmatpush1.msra.mxu0 0.0
    %1162 = vmatprep.subr.mxu0 0.0
    %1163 = vmatpush1.msra.mxu0 0.0
    %1164 = vmatprep.subr.mxu0 0.0
    %1165 = vmatpush1.msra.mxu0 0.0
    %1166 = vmatprep.subr.mxu0 0.0
    %1167 = vmatpush1.msra.mxu0 0.0
    %1168 = vmatprep.subr.mxu0 0.0
    %1169 = vmatpush1.msra.mxu0 0.0
    %1170 = vmatprep.subr.mxu0 0.0
    %1171 = vmatpush1.msra.mxu0 0.0
    %1172 = vmatprep.subr.mxu0 0.0
    %1173 = vmatpush1.msra.mxu0 0.0
    %1174 = vmatprep.subr.mxu0 0.0
    %1175 = vmatpush1.msra.mxu0 0.0
    %1176 = vmatprep.mubr.f32.mxu0 0.0
    %1177 = vmatmul.mubr.f32.gmra.mrb[0].mxu0 %v1038
    %v1178 = vpop.f32.mrb[0].mxu0
    %v1179 = vadd.f32 0.0, %v1178
    %v1180 = vpop.f32.mrb[0].mxu0
    %1181 = vdwg.mxu0
    %v1182 = vadd.f32 %v216, %v1179
    %v1183 = vtanh.pop %v1182
    %v1185 = vsel %vm219, %v1111, 0
    %1187 = vmatprep.subr.mxu0 0.0
    %1188 = vmatpush1.msra.mxu0 %v117
    %1189 = vmatprep.subr.mxu0 0.0
    %1190 = vmatpush1.msra.mxu0 %v118
    %1191 = vmatprep.subr.mxu0 0.0
    %1192 = vmatpush1.msra.mxu0 %v119
    %1193 = vmatprep.subr.mxu0 0.0
    %1194 = vmatpush1.msra.mxu0 %v120
    %1195 = vmatprep.subr.mxu0 0.0
    %1196 = vmatpush1.msra.mxu0 0.0
    %1197 = vmatprep.subr.mxu0 0.0
    %1198 = vmatpush1.msra.mxu0 0.0
    %1199 = vmatprep.subr.mxu0 0.0
    %1200 = vmatpush1.msra.mxu0 0.0
    %1201 = vmatprep.subr.mxu0 0.0
    %1202 = vmatpush1.msra.mxu0 0.0
    %1203 = vmatprep.subr.mxu0 0.0
    %1204 = vmatpush1.msra.mxu0 0.0
    %1205 = vmatprep.subr.mxu0 0.0
    %1206 = vmatpush1.msra.mxu0 0.0
    %1207 = vmatprep.subr.mxu0 0.0
    %1208 = vmatpush1.msra.mxu0 0.0
    %1209 = vmatprep.subr.mxu0 0.0
    %1210 = vmatpush1.msra.mxu0 0.0
    %1211 = vmatprep.subr.mxu0 0.0
    %1212 = vmatpush1.msra.mxu0 0.0
    %1213 = vmatprep.subr.mxu0 0.0
    %1214 = vmatpush1.msra.mxu0 0.0
    %1215 = vmatprep.subr.mxu0 0.0
    %1216 = vmatpush1.msra.mxu0 0.0
    %1217 = vmatprep.subr.mxu0 0.0
    %1218 = vmatpush1.msra.mxu0 0.0
    %1219 = vmatprep.subr.mxu0 0.0
    %1220 = vmatpush1.msra.mxu0 0.0
    %1221 = vmatprep.subr.mxu0 0.0
    %1222 = vmatpush1.msra.mxu0 0.0
    %1223 = vmatprep.subr.mxu0 0.0
    %1224 = vmatpush1.msra.mxu0 0.0
    %1225 = vmatprep.subr.mxu0 0.0
    %1226 = vmatpush1.msra.mxu0 0.0
    %1227 = vmatprep.subr.mxu0 0.0
    %1228 = vmatpush1.msra.mxu0 0.0
    %1229 = vmatprep.subr.mxu0 0.0
    %1230 = vmatpush1.msra.mxu0 0.0
    %1231 = vmatprep.subr.mxu0 0.0
    %1232 = vmatpush1.msra.mxu0 0.0
    %1233 = vmatprep.subr.mxu0 0.0
    %1234 = vmatpush1.msra.mxu0 0.0
    %1235 = vmatprep.subr.mxu0 0.0
    %1236 = vmatpush1.msra.mxu0 0.0
    %1237 = vmatprep.subr.mxu0 0.0
    %1238 = vmatpush1.msra.mxu0 0.0
    %1239 = vmatprep.subr.mxu0 0.0
    %1240 = vmatpush1.msra.mxu0 0.0
    %1241 = vmatprep.subr.mxu0 0.0
    %1242 = vmatpush1.msra.mxu0 0.0
    %1243 = vmatprep.subr.mxu0 0.0
    %1244 = vmatpush1.msra.mxu0 0.0
    %1245 = vmatprep.subr.mxu0 0.0
    %1246 = vmatpush1.msra.mxu0 0.0
    %1247 = vmatprep.subr.mxu0 0.0
    %1248 = vmatpush1.msra.mxu0 0.0
    %1249 = vmatprep.subr.mxu0 0.0
    %1250 = vmatpush1.msra.mxu0 0.0
    %1251 = vmatprep.mubr.f32.mxu0 0.0
    %1252 = vmatmul.mubr.f32.gmra.mrb[0].mxu0 %v1185
    %v1253 = vpop.f32.mrb[0].mxu0
    %v1254 = vadd.f32 0.0, %v1253
    %v1255 = vpop.f32.mrb[0].mxu0
    %1256 = vdwg.mxu0
    %v1258 = vsel %vm219, %v1183, 0
    %1260 = vmatprep.subr.mxu0 0.0
    %1261 = vmatpush1.msra.mxu0 %v109
    %1262 = vmatprep.subr.mxu0 0.0
    %1263 = vmatpush1.msra.mxu0 %v110
    %1264 = vmatprep.subr.mxu0 0.0
    %1265 = vmatpush1.msra.mxu0 %v111
    %1266 = vmatprep.subr.mxu0 0.0
    %1267 = vmatpush1.msra.mxu0 %v112
    %1268 = vmatprep.subr.mxu0 0.0
    %1269 = vmatpush1.msra.mxu0 0.0
    %1270 = vmatprep.subr.mxu0 0.0
    %1271 = vmatpush1.msra.mxu0 0.0
    %1272 = vmatprep.subr.mxu0 0.0
    %1273 = vmatpush1.msra.mxu0 0.0
    %1274 = vmatprep.subr.mxu0 0.0
    %1275 = vmatpush1.msra.mxu0 0.0
    %1276 = vmatprep.subr.mxu0 0.0
    %1277 = vmatpush1.msra.mxu0 0.0
    %1278 = vmatprep.subr.mxu0 0.0
    %1279 = vmatpush1.msra.mxu0 0.0
    %1280 = vmatprep.subr.mxu0 0.0
    %1281 = vmatpush1.msra.mxu0 0.0
    %1282 = vmatprep.subr.mxu0 0.0
    %1283 = vmatpush1.msra.mxu0 0.0
    %1284 = vmatprep.subr.mxu0 0.0
    %1285 = vmatpush1.msra.mxu0 0.0
    %1286 = vmatprep.subr.mxu0 0.0
    %1287 = vmatpush1.msra.mxu0 0.0
    %1288 = vmatprep.subr.mxu0 0.0
    %1289 = vmatpush1.msra.mxu0 0.0
    %1290 = vmatprep.subr.mxu0 0.0
    %1291 = vmatpush1.msra.mxu0 0.0
    %1292 = vmatprep.subr.mxu0 0.0
    %1293 = vmatpush1.msra.mxu0 0.0
    %1294 = vmatprep.subr.mxu0 0.0
    %1295 = vmatpush1.msra.mxu0 0.0
    %1296 = vmatprep.subr.mxu0 0.0
    %1297 = vmatpush1.msra.mxu0 0.0
    %1298 = vmatprep.subr.mxu0 0.0
    %1299 = vmatpush1.msra.mxu0 0.0
    %1300 = vmatprep.subr.mxu0 0.0
    %1301 = vmatpush1.msra.mxu0 0.0
    %1302 = vmatprep.subr.mxu0 0.0
    %1303 = vmatpush1.msra.mxu0 0.0
    %1304 = vmatprep.subr.mxu0 0.0
    %1305 = vmatpush1.msra.mxu0 0.0
    %1306 = vmatprep.subr.mxu0 0.0
    %1307 = vmatpush1.msra.mxu0 0.0
    %1308 = vmatprep.subr.mxu0 0.0
    %1309 = vmatpush1.msra.mxu0 0.0
    %1310 = vmatprep.subr.mxu0 0.0
    %1311 = vmatpush1.msra.mxu0 0.0
    %1312 = vmatprep.subr.mxu0 0.0
    %1313 = vmatpush1.msra.mxu0 0.0
    %1314 = vmatprep.subr.mxu0 0.0
    %1315 = vmatpush1.msra.mxu0 0.0
    %1316 = vmatprep.subr.mxu0 0.0
    %1317 = vmatpush1.msra.mxu0 0.0
    %1318 = vmatprep.subr.mxu0 0.0
    %1319 = vmatpush1.msra.mxu0 0.0
    %1320 = vmatprep.subr.mxu0 0.0
    %1321 = vmatpush1.msra.mxu0 0.0
    %1322 = vmatprep.subr.mxu0 0.0
    %1323 = vmatpush1.msra.mxu0 0.0
    %1324 = vmatprep.mubr.f32.mxu0 0.0
    %1325 = vmatmul.mubr.f32.gmra.mrb[0].mxu0 %v1258
    %v1326 = vpop.f32.mrb[0].mxu0
    %v1327 = vadd.f32 %v1254, %v1326
    %v1328 = vpop.f32.mrb[0].mxu0
    %1329 = vdwg.mxu0
    %v1330 = vadd.f32 %v1327, %v126
    %v1331 = vtanh.pop %v1330
    %1332 = vmatprep.subr.mxu0 0.0
    %1333 = vmatpush1.msra.mxu0 %v113
    %1334 = vmatprep.subr.mxu0 0.0
    %1335 = vmatpush1.msra.mxu0 %v114
    %1336 = vmatprep.subr.mxu0 0.0
    %1337 = vmatpush1.msra.mxu0 %v115
    %1338 = vmatprep.subr.mxu0 0.0
    %1339 = vmatpush1.msra.mxu0 %v116
    %1340 = vmatprep.subr.mxu0 0.0
    %1341 = vmatpush1.msra.mxu0 0.0
    %1342 = vmatprep.subr.mxu0 0.0
    %1343 = vmatpush1.msra.mxu0 0.0
    %1344 = vmatprep.subr.mxu0 0.0
    %1345 = vmatpush1.msra.mxu0 0.0
    %1346 = vmatprep.subr.mxu0 0.0
    %1347 = vmatpush1.msra.mxu0 0.0
    %1348 = vmatprep.subr.mxu0 0.0
    %1349 = vmatpush1.msra.mxu0 0.0
    %1350 = vmatprep.subr.mxu0 0.0
    %1351 = vmatpush1.msra.mxu0 0.0
    %1352 = vmatprep.subr.mxu0 0.0
    %1353 = vmatpush1.msra.mxu0 0.0
    %1354 = vmatprep.subr.mxu0 0.0
    %1355 = vmatpush1.msra.mxu0 0.0
    %1356 = vmatprep.subr.mxu0 0.0
    %1357 = vmatpush1.msra.mxu0 0.0
    %1358 = vmatprep.subr.mxu0 0.0
    %1359 = vmatpush1.msra.mxu0 0.0
    %1360 = vmatprep.subr.mxu0 0.0
    %1361 = vmatpush1.msra.mxu0 0.0
    %1362 = vmatprep.subr.mxu0 0.0
    %1363 = vmatpush1.msra.mxu0 0.0
    %1364 = vmatprep.subr.mxu0 0.0
    %1365 = vmatpush1.msra.mxu0 0.0
    %1366 = vmatprep.subr.mxu0 0.0
    %1367 = vmatpush1.msra.mxu0 0.0
    %1368 = vmatprep.subr.mxu0 0.0
    %1369 = vmatpush1.msra.mxu0 0.0
    %1370 = vmatprep.subr.mxu0 0.0
    %1371 = vmatpush1.msra.mxu0 0.0
    %1372 = vmatprep.subr.mxu0 0.0
    %1373 = vmatpush1.msra.mxu0 0.0
    %1374 = vmatprep.subr.mxu0 0.0
    %1375 = vmatpush1.msra.mxu0 0.0
    %1376 = vmatprep.subr.mxu0 0.0
    %1377 = vmatpush1.msra.mxu0 0.0
    %1378 = vmatprep.subr.mxu0 0.0
    %1379 = vmatpush1.msra.mxu0 0.0
    %1380 = vmatprep.subr.mxu0 0.0
    %1381 = vmatpush1.msra.mxu0 0.0
    %1382 = vmatprep.subr.mxu0 0.0
    %1383 = vmatpush1.msra.mxu0 0.0
    %1384 = vmatprep.subr.mxu0 0.0
    %1385 = vmatpush1.msra.mxu0 0.0
    %1386 = vmatprep.subr.mxu0 0.0
    %1387 = vmatpush1.msra.mxu0 0.0
    %1388 = vmatprep.subr.mxu0 0.0
    %1389 = vmatpush1.msra.mxu0 0.0
    %1390 = vmatprep.subr.mxu0 0.0
    %1391 = vmatpush1.msra.mxu0 0.0
    %1392 = vmatprep.subr.mxu0 0.0
    %1393 = vmatpush1.msra.mxu0 0.0
    %1394 = vmatprep.subr.mxu0 0.0
    %1395 = vmatpush1.msra.mxu0 0.0
    %1396 = vmatprep.mubr.f32.mxu0 0.0
    %1397 = vmatmul.mubr.f32.gmra.mrb[0].mxu0 %v1258
    %v1398 = vpop.f32.mrb[0].mxu0
    %v1399 = vadd.f32 0.0, %v1398
    %v1400 = vpop.f32.mrb[0].mxu0
    %1401 = vdwg.mxu0
    %v1403 = vrot.slane %v1399, 6
    %v1405 = vadd.f32 %v216, %v1403
    %v1406 = vtanh.pop %v1405
    %v1408 = vsel %vm219, %v1331, 0
    %1410 = vmatprep.subr.mxu0 0.0
    %1411 = vmatpush1.msra.mxu0 %v117
    %1412 = vmatprep.subr.mxu0 0.0
    %1413 = vmatpush1.msra.mxu0 %v118
    %1414 = vmatprep.subr.mxu0 0.0
    %1415 = vmatpush1.msra.mxu0 %v119
    %1416 = vmatprep.subr.mxu0 0.0
    %1417 = vmatpush1.msra.mxu0 %v120
    %1418 = vmatprep.subr.mxu0 0.0
    %1419 = vmatpush1.msra.mxu0 0.0
    %1420 = vmatprep.subr.mxu0 0.0
    %1421 = vmatpush1.msra.mxu0 0.0
    %1422 = vmatprep.subr.mxu0 0.0
    %1423 = vmatpush1.msra.mxu0 0.0
    %1424 = vmatprep.subr.mxu0 0.0
    %1425 = vmatpush1.msra.mxu0 0.0
    %1426 = vmatprep.subr.mxu0 0.0
    %1427 = vmatpush1.msra.mxu0 0.0
    %1428 = vmatprep.subr.mxu0 0.0
    %1429 = vmatpush1.msra.mxu0 0.0
    %1430 = vmatprep.subr.mxu0 0.0
    %1431 = vmatpush1.msra.mxu0 0.0
    %1432 = vmatprep.subr.mxu0 0.0
    %1433 = vmatpush1.msra.mxu0 0.0
    %1434 = vmatprep.subr.mxu0 0.0
    %1435 = vmatpush1.msra.mxu0 0.0
    %1436 = vmatprep.subr.mxu0 0.0
    %1437 = vmatpush1.msra.mxu0 0.0
    %1438 = vmatprep.subr.mxu0 0.0
    %1439 = vmatpush1.msra.mxu0 0.0
    %1440 = vmatprep.subr.mxu0 0.0
    %1441 = vmatpush1.msra.mxu0 0.0
    %1442 = vmatprep.subr.mxu0 0.0
    %1443 = vmatpush1.msra.mxu0 0.0
    %1444 = vmatprep.subr.mxu0 0.0
    %1445 = vmatpush1.msra.mxu0 0.0
    %1446 = vmatprep.subr.mxu0 0.0
    %1447 = vmatpush1.msra.mxu0 0.0
    %1448 = vmatprep.subr.mxu0 0.0
    %1449 = vmatpush1.msra.mxu0 0.0
    %1450 = vmatprep.subr.mxu0 0.0
    %1451 = vmatpush1.msra.mxu0 0.0
    %1452 = vmatprep.subr.mxu0 0.0
    %1453 = vmatpush1.msra.mxu0 0.0
    %1454 = vmatprep.subr.mxu0 0.0
    %1455 = vmatpush1.msra.mxu0 0.0
    %1456 = vmatprep.subr.mxu0 0.0
    %1457 = vmatpush1.msra.mxu0 0.0
    %1458 = vmatprep.subr.mxu0 0.0
    %1459 = vmatpush1.msra.mxu0 0.0
    %1460 = vmatprep.subr.mxu0 0.0
    %1461 = vmatpush1.msra.mxu0 0.0
    %1462 = vmatprep.subr.mxu0 0.0
    %1463 = vmatpush1.msra.mxu0 0.0
    %1464 = vmatprep.subr.mxu0 0.0
    %1465 = vmatpush1.msra.mxu0 0.0
    %1466 = vmatprep.subr.mxu0 0.0
    %1467 = vmatpush1.msra.mxu0 0.0
    %1468 = vmatprep.subr.mxu0 0.0
    %1469 = vmatpush1.msra.mxu0 0.0
    %1470 = vmatprep.subr.mxu0 0.0
    %1471 = vmatpush1.msra.mxu0 0.0
    %1472 = vmatprep.subr.mxu0 0.0
    %1473 = vmatpush1.msra.mxu0 0.0
    %1474 = vmatprep.mubr.f32.mxu0 0.0
    %1475 = vmatmul.mubr.f32.gmra.mrb[0].mxu0 %v1408
    %v1476 = vpop.f32.mrb[0].mxu0
    %v1477 = vadd.f32 0.0, %v1476
    %v1478 = vpop.f32.mrb[0].mxu0
    %1479 = vdwg.mxu0
    %v1481 = vrot.slane %v1406, 2
    %v1482 = vsel %vm219, %v1481, 0
    %1484 = vmatprep.subr.mxu0 0.0
    %1485 = vmatpush1.msra.mxu0 %v109
    %1486 = vmatprep.subr.mxu0 0.0
    %1487 = vmatpush1.msra.mxu0 %v110
    %1488 = vmatprep.subr.mxu0 0.0
    %1489 = vmatpush1.msra.mxu0 %v111
    %1490 = vmatprep.subr.mxu0 0.0
    %1491 = vmatpush1.msra.mxu0 %v112
    %1492 = vmatprep.subr.mxu0 0.0
    %1493 = vmatpush1.msra.mxu0 0.0
    %1494 = vmatprep.subr.mxu0 0.0
    %1495 = vmatpush1.msra.mxu0 0.0
    %1496 = vmatprep.subr.mxu0 0.0
    %1497 = vmatpush1.msra.mxu0 0.0
    %1498 = vmatprep.subr.mxu0 0.0
    %1499 = vmatpush1.msra.mxu0 0.0
    %1500 = vmatprep.subr.mxu0 0.0
    %1501 = vmatpush1.msra.mxu0 0.0
    %1502 = vmatprep.subr.mxu0 0.0
    %1503 = vmatpush1.msra.mxu0 0.0
    %1504 = vmatprep.subr.mxu0 0.0
    %1505 = vmatpush1.msra.mxu0 0.0
    %1506 = vmatprep.subr.mxu0 0.0
    %1507 = vmatpush1.msra.mxu0 0.0
    %1508 = vmatprep.subr.mxu0 0.0
    %1509 = vmatpush1.msra.mxu0 0.0
    %1510 = vmatprep.subr.mxu0 0.0
    %1511 = vmatpush1.msra.mxu0 0.0
    %1512 = vmatprep.subr.mxu0 0.0
    %1513 = vmatpush1.msra.mxu0 0.0
    %1514 = vmatprep.subr.mxu0 0.0
    %1515 = vmatpush1.msra.mxu0 0.0
    %1516 = vmatprep.subr.mxu0 0.0
    %1517 = vmatpush1.msra.mxu0 0.0
    %1518 = vmatprep.subr.mxu0 0.0
    %1519 = vmatpush1.msra.mxu0 0.0
    %1520 = vmatprep.subr.mxu0 0.0
    %1521 = vmatpush1.msra.mxu0 0.0
    %1522 = vmatprep.subr.mxu0 0.0
    %1523 = vmatpush1.msra.mxu0 0.0
    %1524 = vmatprep.subr.mxu0 0.0
    %1525 = vmatpush1.msra.mxu0 0.0
    %1526 = vmatprep.subr.mxu0 0.0
    %1527 = vmatpush1.msra.mxu0 0.0
    %1528 = vmatprep.subr.mxu0 0.0
    %1529 = vmatpush1.msra.mxu0 0.0
    %1530 = vmatprep.subr.mxu0 0.0
    %1531 = vmatpush1.msra.mxu0 0.0
    %1532 = vmatprep.subr.mxu0 0.0
    %1533 = vmatpush1.msra.mxu0 0.0
    %1534 = vmatprep.subr.mxu0 0.0
    %1535 = vmatpush1.msra.mxu0 0.0
    %1536 = vmatprep.subr.mxu0 0.0
    %1537 = vmatpush1.msra.mxu0 0.0
    %1538 = vmatprep.subr.mxu0 0.0
    %1539 = vmatpush1.msra.mxu0 0.0
    %1540 = vmatprep.subr.mxu0 0.0
    %1541 = vmatpush1.msra.mxu0 0.0
    %1542 = vmatprep.subr.mxu0 0.0
    %1543 = vmatpush1.msra.mxu0 0.0
    %1544 = vmatprep.subr.mxu0 0.0
    %1545 = vmatpush1.msra.mxu0 0.0
    %1546 = vmatprep.subr.mxu0 0.0
    %1547 = vmatpush1.msra.mxu0 0.0
    %1548 = vmatprep.mubr.f32.mxu0 0.0
    %1549 = vmatmul.mubr.f32.gmra.mrb[0].mxu0 %v1482
    %v1550 = vpop.f32.mrb[0].mxu0
    %v1551 = vadd.f32 %v1477, %v1550
    %v1552 = vpop.f32.mrb[0].mxu0
    %1553 = vdwg.mxu0
    %v1554 = vadd.f32 %v1551, %v126
    %v1555 = vtanh.pop %v1554
    %1556 = vmatprep.subr.mxu0 0.0
    %1557 = vmatpush1.msra.mxu0 %v113
    %1558 = vmatprep.subr.mxu0 0.0
    %1559 = vmatpush1.msra.mxu0 %v114
    %1560 = vmatprep.subr.mxu0 0.0
    %1561 = vmatpush1.msra.mxu0 %v115
    %1562 = vmatprep.subr.mxu0 0.0
    %1563 = vmatpush1.msra.mxu0 %v116
    %1564 = vmatprep.subr.mxu0 0.0
    %1565 = vmatpush1.msra.mxu0 0.0
    %1566 = vmatprep.subr.mxu0 0.0
    %1567 = vmatpush1.msra.mxu0 0.0
    %1568 = vmatprep.subr.mxu0 0.0
    %1569 = vmatpush1.msra.mxu0 0.0
    %1570 = vmatprep.subr.mxu0 0.0
    %1571 = vmatpush1.msra.mxu0 0.0
    %1572 = vmatprep.subr.mxu0 0.0
    %1573 = vmatpush1.msra.mxu0 0.0
    %1574 = vmatprep.subr.mxu0 0.0
    %1575 = vmatpush1.msra.mxu0 0.0
    %1576 = vmatprep.subr.mxu0 0.0
    %1577 = vmatpush1.msra.mxu0 0.0
    %1578 = vmatprep.subr.mxu0 0.0
    %1579 = vmatpush1.msra.mxu0 0.0
    %1580 = vmatprep.subr.mxu0 0.0
    %1581 = vmatpush1.msra.mxu0 0.0
    %1582 = vmatprep.subr.mxu0 0.0
    %1583 = vmatpush1.msra.mxu0 0.0
    %1584 = vmatprep.subr.mxu0 0.0
    %1585 = vmatpush1.msra.mxu0 0.0
    %1586 = vmatprep.subr.mxu0 0.0
    %1587 = vmatpush1.msra.mxu0 0.0
    %1588 = vmatprep.subr.mxu0 0.0
    %1589 = vmatpush1.msra.mxu0 0.0
    %1590 = vmatprep.subr.mxu0 0.0
    %1591 = vmatpush1.msra.mxu0 0.0
    %1592 = vmatprep.subr.mxu0 0.0
    %1593 = vmatpush1.msra.mxu0 0.0
    %1594 = vmatprep.subr.mxu0 0.0
    %1595 = vmatpush1.msra.mxu0 0.0
    %1596 = vmatprep.subr.mxu0 0.0
    %1597 = vmatpush1.msra.mxu0 0.0
    %1598 = vmatprep.subr.mxu0 0.0
    %1599 = vmatpush1.msra.mxu0 0.0
    %1600 = vmatprep.subr.mxu0 0.0
    %1601 = vmatpush1.msra.mxu0 0.0
    %1602 = vmatprep.subr.mxu0 0.0
    %1603 = vmatpush1.msra.mxu0 0.0
    %1604 = vmatprep.subr.mxu0 0.0
    %1605 = vmatpush1.msra.mxu0 0.0
    %1606 = vmatprep.subr.mxu0 0.0
    %1607 = vmatpush1.msra.mxu0 0.0
    %1608 = vmatprep.subr.mxu0 0.0
    %1609 = vmatpush1.msra.mxu0 0.0
    %1610 = vmatprep.subr.mxu0 0.0
    %1611 = vmatpush1.msra.mxu0 0.0
    %1612 = vmatprep.subr.mxu0 0.0
    %1613 = vmatpush1.msra.mxu0 0.0
    %1614 = vmatprep.subr.mxu0 0.0
    %1615 = vmatpush1.msra.mxu0 0.0
    %1616 = vmatprep.subr.mxu0 0.0
    %1617 = vmatpush1.msra.mxu0 0.0
    %1618 = vmatprep.subr.mxu0 0.0
    %1619 = vmatpush1.msra.mxu0 0.0
    %1620 = vmatprep.mubr.f32.mxu0 0.0
    %1621 = vmatmul.mubr.f32.gmra.mrb[0].mxu0 %v1482
    %v1622 = vpop.f32.mrb[0].mxu0
    %v1623 = vadd.f32 0.0, %v1622
    %v1624 = vpop.f32.mrb[0].mxu0
    %1625 = vdwg.mxu0
    %v1627 = vrot.slane %v1623, 4
    %v1629 = vadd.f32 %v216, %v1627
    %v1630 = vtanh.pop %v1629
    %v1632 = vsel %vm219, %v1555, 0
    %1634 = vmatprep.subr.mxu0 0.0
    %1635 = vmatpush1.msra.mxu0 %v117
    %1636 = vmatprep.subr.mxu0 0.0
    %1637 = vmatpush1.msra.mxu0 %v118
    %1638 = vmatprep.subr.mxu0 0.0
    %1639 = vmatpush1.msra.mxu0 %v119
    %1640 = vmatprep.subr.mxu0 0.0
    %1641 = vmatpush1.msra.mxu0 %v120
    %1642 = vmatprep.subr.mxu0 0.0
    %1643 = vmatpush1.msra.mxu0 0.0
    %1644 = vmatprep.subr.mxu0 0.0
    %1645 = vmatpush1.msra.mxu0 0.0
    %1646 = vmatprep.subr.mxu0 0.0
    %1647 = vmatpush1.msra.mxu0 0.0
    %1648 = vmatprep.subr.mxu0 0.0
    %1649 = vmatpush1.msra.mxu0 0.0
    %1650 = vmatprep.subr.mxu0 0.0
    %1651 = vmatpush1.msra.mxu0 0.0
    %1652 = vmatprep.subr.mxu0 0.0
    %1653 = vmatpush1.msra.mxu0 0.0
    %1654 = vmatprep.subr.mxu0 0.0
    %1655 = vmatpush1.msra.mxu0 0.0
    %1656 = vmatprep.subr.mxu0 0.0
    %1657 = vmatpush1.msra.mxu0 0.0
    %1658 = vmatprep.subr.mxu0 0.0
    %1659 = vmatpush1.msra.mxu0 0.0
    %1660 = vmatprep.subr.mxu0 0.0
    %1661 = vmatpush1.msra.mxu0 0.0
    %1662 = vmatprep.subr.mxu0 0.0
    %1663 = vmatpush1.msra.mxu0 0.0
    %1664 = vmatprep.subr.mxu0 0.0
    %1665 = vmatpush1.msra.mxu0 0.0
    %1666 = vmatprep.subr.mxu0 0.0
    %1667 = vmatpush1.msra.mxu0 0.0
    %1668 = vmatprep.subr.mxu0 0.0
    %1669 = vmatpush1.msra.mxu0 0.0
    %1670 = vmatprep.subr.mxu0 0.0
    %1671 = vmatpush1.msra.mxu0 0.0
    %1672 = vmatprep.subr.mxu0 0.0
    %1673 = vmatpush1.msra.mxu0 0.0
    %1674 = vmatprep.subr.mxu0 0.0
    %1675 = vmatpush1.msra.mxu0 0.0
    %1676 = vmatprep.subr.mxu0 0.0
    %1677 = vmatpush1.msra.mxu0 0.0
    %1678 = vmatprep.subr.mxu0 0.0
    %1679 = vmatpush1.msra.mxu0 0.0
    %1680 = vmatprep.subr.mxu0 0.0
    %1681 = vmatpush1.msra.mxu0 0.0
    %1682 = vmatprep.subr.mxu0 0.0
    %1683 = vmatpush1.msra.mxu0 0.0
    %1684 = vmatprep.subr.mxu0 0.0
    %1685 = vmatpush1.msra.mxu0 0.0
    %1686 = vmatprep.subr.mxu0 0.0
    %1687 = vmatpush1.msra.mxu0 0.0
    %1688 = vmatprep.subr.mxu0 0.0
    %1689 = vmatpush1.msra.mxu0 0.0
    %1690 = vmatprep.subr.mxu0 0.0
    %1691 = vmatpush1.msra.mxu0 0.0
    %1692 = vmatprep.subr.mxu0 0.0
    %1693 = vmatpush1.msra.mxu0 0.0
    %1694 = vmatprep.subr.mxu0 0.0
    %1695 = vmatpush1.msra.mxu0 0.0
    %1696 = vmatprep.subr.mxu0 0.0
    %1697 = vmatpush1.msra.mxu0 0.0
    %1698 = vmatprep.mubr.f32.mxu0 0.0
    %1699 = vmatmul.mubr.f32.gmra.mrb[0].mxu0 %v1632
    %v1700 = vpop.f32.mrb[0].mxu0
    %v1701 = vadd.f32 0.0, %v1700
    %v1702 = vpop.f32.mrb[0].mxu0
    %1703 = vdwg.mxu0
    %v1705 = vrot.slane %v1630, 4
    %v1706 = vsel %vm219, %v1705, 0
    %1708 = vmatprep.subr.mxu0 0.0
    %1709 = vmatpush1.msra.mxu0 %v109
    %1710 = vmatprep.subr.mxu0 0.0
    %1711 = vmatpush1.msra.mxu0 %v110
    %1712 = vmatprep.subr.mxu0 0.0
    %1713 = vmatpush1.msra.mxu0 %v111
    %1714 = vmatprep.subr.mxu0 0.0
    %1715 = vmatpush1.msra.mxu0 %v112
    %1716 = vmatprep.subr.mxu0 0.0
    %1717 = vmatpush1.msra.mxu0 0.0
    %1718 = vmatprep.subr.mxu0 0.0
    %1719 = vmatpush1.msra.mxu0 0.0
    %1720 = vmatprep.subr.mxu0 0.0
    %1721 = vmatpush1.msra.mxu0 0.0
    %1722 = vmatprep.subr.mxu0 0.0
    %1723 = vmatpush1.msra.mxu0 0.0
    %1724 = vmatprep.subr.mxu0 0.0
    %1725 = vmatpush1.msra.mxu0 0.0
    %1726 = vmatprep.subr.mxu0 0.0
    %1727 = vmatpush1.msra.mxu0 0.0
    %1728 = vmatprep.subr.mxu0 0.0
    %1729 = vmatpush1.msra.mxu0 0.0
    %1730 = vmatprep.subr.mxu0 0.0
    %1731 = vmatpush1.msra.mxu0 0.0
    %1732 = vmatprep.subr.mxu0 0.0
    %1733 = vmatpush1.msra.mxu0 0.0
    %1734 = vmatprep.subr.mxu0 0.0
    %1735 = vmatpush1.msra.mxu0 0.0
    %1736 = vmatprep.subr.mxu0 0.0
    %1737 = vmatpush1.msra.mxu0 0.0
    %1738 = vmatprep.subr.mxu0 0.0
    %1739 = vmatpush1.msra.mxu0 0.0
    %1740 = vmatprep.subr.mxu0 0.0
    %1741 = vmatpush1.msra.mxu0 0.0
    %1742 = vmatprep.subr.mxu0 0.0
    %1743 = vmatpush1.msra.mxu0 0.0
    %1744 = vmatprep.subr.mxu0 0.0
    %1745 = vmatpush1.msra.mxu0 0.0
    %1746 = vmatprep.subr.mxu0 0.0
    %1747 = vmatpush1.msra.mxu0 0.0
    %1748 = vmatprep.subr.mxu0 0.0
    %1749 = vmatpush1.msra.mxu0 0.0
    %1750 = vmatprep.subr.mxu0 0.0
    %1751 = vmatpush1.msra.mxu0 0.0
    %1752 = vmatprep.subr.mxu0 0.0
    %1753 = vmatpush1.msra.mxu0 0.0
    %1754 = vmatprep.subr.mxu0 0.0
    %1755 = vmatpush1.msra.mxu0 0.0
    %1756 = vmatprep.subr.mxu0 0.0
    %1757 = vmatpush1.msra.mxu0 0.0
    %1758 = vmatprep.subr.mxu0 0.0
    %1759 = vmatpush1.msra.mxu0 0.0
    %1760 = vmatprep.subr.mxu0 0.0
    %1761 = vmatpush1.msra.mxu0 0.0
    %1762 = vmatprep.subr.mxu0 0.0
    %1763 = vmatpush1.msra.mxu0 0.0
    %1764 = vmatprep.subr.mxu0 0.0
    %1765 = vmatpush1.msra.mxu0 0.0
    %1766 = vmatprep.subr.mxu0 0.0
    %1767 = vmatpush1.msra.mxu0 0.0
    %1768 = vmatprep.subr.mxu0 0.0
    %1769 = vmatpush1.msra.mxu0 0.0
    %1770 = vmatprep.subr.mxu0 0.0
    %1771 = vmatpush1.msra.mxu0 0.0
    %1772 = vmatprep.mubr.f32.mxu0 0.0
    %1773 = vmatmul.mubr.f32.gmra.mrb[0].mxu0 %v1706
    %v1774 = vpop.f32.mrb[0].mxu0
    %v1775 = vadd.f32 %v1701, %v1774
    %v1776 = vpop.f32.mrb[0].mxu0
    %1777 = vdwg.mxu0
    %v1778 = vadd.f32 %v1775, %v126
    %v1779 = vtanh.pop %v1778
    %1780 = vmatprep.subr.mxu0 0.0
    %1781 = vmatpush1.msra.mxu0 %v113
    %1782 = vmatprep.subr.mxu0 0.0
    %1783 = vmatpush1.msra.mxu0 %v114
    %1784 = vmatprep.subr.mxu0 0.0
    %1785 = vmatpush1.msra.mxu0 %v115
    %1786 = vmatprep.subr.mxu0 0.0
    %1787 = vmatpush1.msra.mxu0 %v116
    %1788 = vmatprep.subr.mxu0 0.0
    %1789 = vmatpush1.msra.mxu0 0.0
    %1790 = vmatprep.subr.mxu0 0.0
    %1791 = vmatpush1.msra.mxu0 0.0
    %1792 = vmatprep.subr.mxu0 0.0
    %1793 = vmatpush1.msra.mxu0 0.0
    %1794 = vmatprep.subr.mxu0 0.0
    %1795 = vmatpush1.msra.mxu0 0.0
    %1796 = vmatprep.subr.mxu0 0.0
    %1797 = vmatpush1.msra.mxu0 0.0
    %1798 = vmatprep.subr.mxu0 0.0
    %1799 = vmatpush1.msra.mxu0 0.0
    %1800 = vmatprep.subr.mxu0 0.0
    %1801 = vmatpush1.msra.mxu0 0.0
    %1802 = vmatprep.subr.mxu0 0.0
    %1803 = vmatpush1.msra.mxu0 0.0
    %1804 = vmatprep.subr.mxu0 0.0
    %1805 = vmatpush1.msra.mxu0 0.0
    %1806 = vmatprep.subr.mxu0 0.0
    %1807 = vmatpush1.msra.mxu0 0.0
    %1808 = vmatprep.subr.mxu0 0.0
    %1809 = vmatpush1.msra.mxu0 0.0
    %1810 = vmatprep.subr.mxu0 0.0
    %1811 = vmatpush1.msra.mxu0 0.0
    %1812 = vmatprep.subr.mxu0 0.0
    %1813 = vmatpush1.msra.mxu0 0.0
    %1814 = vmatprep.subr.mxu0 0.0
    %1815 = vmatpush1.msra.mxu0 0.0
    %1816 = vmatprep.subr.mxu0 0.0
    %1817 = vmatpush1.msra.mxu0 0.0
    %1818 = vmatprep.subr.mxu0 0.0
    %1819 = vmatpush1.msra.mxu0 0.0
    %1820 = vmatprep.subr.mxu0 0.0
    %1821 = vmatpush1.msra.mxu0 0.0
    %1822 = vmatprep.subr.mxu0 0.0
    %1823 = vmatpush1.msra.mxu0 0.0
    %1824 = vmatprep.subr.mxu0 0.0
    %1825 = vmatpush1.msra.mxu0 0.0
    %1826 = vmatprep.subr.mxu0 0.0
    %1827 = vmatpush1.msra.mxu0 0.0
    %1828 = vmatprep.subr.mxu0 0.0
    %1829 = vmatpush1.msra.mxu0 0.0
    %1830 = vmatprep.subr.mxu0 0.0
    %1831 = vmatpush1.msra.mxu0 0.0
    %1832 = vmatprep.subr.mxu0 0.0
    %1833 = vmatpush1.msra.mxu0 0.0
    %1834 = vmatprep.subr.mxu0 0.0
    %1835 = vmatpush1.msra.mxu0 0.0
    %1836 = vmatprep.subr.mxu0 0.0
    %1837 = vmatpush1.msra.mxu0 0.0
    %1838 = vmatprep.subr.mxu0 0.0
    %1839 = vmatpush1.msra.mxu0 0.0
    %1840 = vmatprep.subr.mxu0 0.0
    %1841 = vmatpush1.msra.mxu0 0.0
    %1842 = vmatprep.subr.mxu0 0.0
    %1843 = vmatpush1.msra.mxu0 0.0
    %1844 = vmatprep.mubr.f32.mxu0 0.0
    %1845 = vmatmul.mubr.f32.gmra.mrb[0].mxu0 %v1706
    %v1846 = vpop.f32.mrb[0].mxu0
    %v1847 = vadd.f32 0.0, %v1846
    %v1848 = vpop.f32.mrb[0].mxu0
    %1849 = vdwg.mxu0
    %v1851 = vrot.slane %v1847, 2
    %v1853 = vadd.f32 %v216, %v1851
    %v1854 = vtanh.pop %v1853
    %v1856 = vsel %vm219, %v1779, 0
    %1858 = vmatprep.subr.mxu0 0.0
    %1859 = vmatpush1.msra.mxu0 %v117
    %1860 = vmatprep.subr.mxu0 0.0
    %1861 = vmatpush1.msra.mxu0 %v118
    %1862 = vmatprep.subr.mxu0 0.0
    %1863 = vmatpush1.msra.mxu0 %v119
    %1864 = vmatprep.subr.mxu0 0.0
    %1865 = vmatpush1.msra.mxu0 %v120
    %1866 = vmatprep.subr.mxu0 0.0
    %1867 = vmatpush1.msra.mxu0 0.0
    %1868 = vmatprep.subr.mxu0 0.0
    %1869 = vmatpush1.msra.mxu0 0.0
    %1870 = vmatprep.subr.mxu0 0.0
    %1871 = vmatpush1.msra.mxu0 0.0
    %1872 = vmatprep.subr.mxu0 0.0
    %1873 = vmatpush1.msra.mxu0 0.0
    %1874 = vmatprep.subr.mxu0 0.0
    %1875 = vmatpush1.msra.mxu0 0.0
    %1876 = vmatprep.subr.mxu0 0.0
    %1877 = vmatpush1.msra.mxu0 0.0
    %1878 = vmatprep.subr.mxu0 0.0
    %1879 = vmatpush1.msra.mxu0 0.0
    %1880 = vmatprep.subr.mxu0 0.0
    %1881 = vmatpush1.msra.mxu0 0.0
    %1882 = vmatprep.subr.mxu0 0.0
    %1883 = vmatpush1.msra.mxu0 0.0
    %1884 = vmatprep.subr.mxu0 0.0
    %1885 = vmatpush1.msra.mxu0 0.0
    %1886 = vmatprep.subr.mxu0 0.0
    %1887 = vmatpush1.msra.mxu0 0.0
    %1888 = vmatprep.subr.mxu0 0.0
    %1889 = vmatpush1.msra.mxu0 0.0
    %1890 = vmatprep.subr.mxu0 0.0
    %1891 = vmatpush1.msra.mxu0 0.0
    %1892 = vmatprep.subr.mxu0 0.0
    %1893 = vmatpush1.msra.mxu0 0.0
    %1894 = vmatprep.subr.mxu0 0.0
    %1895 = vmatpush1.msra.mxu0 0.0
    %1896 = vmatprep.subr.mxu0 0.0
    %1897 = vmatpush1.msra.mxu0 0.0
    %1898 = vmatprep.subr.mxu0 0.0
    %1899 = vmatpush1.msra.mxu0 0.0
    %1900 = vmatprep.subr.mxu0 0.0
    %1901 = vmatpush1.msra.mxu0 0.0
    %1902 = vmatprep.subr.mxu0 0.0
    %1903 = vmatpush1.msra.mxu0 0.0
    %1904 = vmatprep.subr.mxu0 0.0
    %1905 = vmatpush1.msra.mxu0 0.0
    %1906 = vmatprep.subr.mxu0 0.0
    %1907 = vmatpush1.msra.mxu0 0.0
    %1908 = vmatprep.subr.mxu0 0.0
    %1909 = vmatpush1.msra.mxu0 0.0
    %1910 = vmatprep.subr.mxu0 0.0
    %1911 = vmatpush1.msra.mxu0 0.0
    %1912 = vmatprep.subr.mxu0 0.0
    %1913 = vmatpush1.msra.mxu0 0.0
    %1914 = vmatprep.subr.mxu0 0.0
    %1915 = vmatpush1.msra.mxu0 0.0
    %1916 = vmatprep.subr.mxu0 0.0
    %1917 = vmatpush1.msra.mxu0 0.0
    %1918 = vmatprep.subr.mxu0 0.0
    %1919 = vmatpush1.msra.mxu0 0.0
    %1920 = vmatprep.subr.mxu0 0.0
    %1921 = vmatpush1.msra.mxu0 0.0
    %1922 = vmatprep.mubr.f32.mxu0 0.0
    %1923 = vmatmul.mubr.f32.gmra.mrb[0].mxu0 %v1856
    %v1924 = vpop.f32.mrb[0].mxu0
    %v1925 = vadd.f32 0.0, %v1924
    %v1926 = vpop.f32.mrb[0].mxu0
    %1927 = vdwg.mxu0
    %v1929 = vrot.slane %v1854, 6
    %v1930 = vsel %vm219, %v1929, 0
    %1932 = vmatprep.subr.mxu0 0.0
    %1933 = vmatpush1.msra.mxu0 %v109
    %1934 = vmatprep.subr.mxu0 0.0
    %1935 = vmatpush1.msra.mxu0 %v110
    %1936 = vmatprep.subr.mxu0 0.0
    %1937 = vmatpush1.msra.mxu0 %v111
    %1938 = vmatprep.subr.mxu0 0.0
    %1939 = vmatpush1.msra.mxu0 %v112
    %1940 = vmatprep.subr.mxu0 0.0
    %1941 = vmatpush1.msra.mxu0 0.0
    %1942 = vmatprep.subr.mxu0 0.0
    %1943 = vmatpush1.msra.mxu0 0.0
    %1944 = vmatprep.subr.mxu0 0.0
    %1945 = vmatpush1.msra.mxu0 0.0
    %1946 = vmatprep.subr.mxu0 0.0
    %1947 = vmatpush1.msra.mxu0 0.0
    %1948 = vmatprep.subr.mxu0 0.0
    %1949 = vmatpush1.msra.mxu0 0.0
    %1950 = vmatprep.subr.mxu0 0.0
    %1951 = vmatpush1.msra.mxu0 0.0
    %1952 = vmatprep.subr.mxu0 0.0
    %1953 = vmatpush1.msra.mxu0 0.0
    %1954 = vmatprep.subr.mxu0 0.0
    %1955 = vmatpush1.msra.mxu0 0.0
    %1956 = vmatprep.subr.mxu0 0.0
    %1957 = vmatpush1.msra.mxu0 0.0
    %1958 = vmatprep.subr.mxu0 0.0
    %1959 = vmatpush1.msra.mxu0 0.0
    %1960 = vmatprep.subr.mxu0 0.0
    %1961 = vmatpush1.msra.mxu0 0.0
    %1962 = vmatprep.subr.mxu0 0.0
    %1963 = vmatpush1.msra.mxu0 0.0
    %1964 = vmatprep.subr.mxu0 0.0
    %1965 = vmatpush1.msra.mxu0 0.0
    %1966 = vmatprep.subr.mxu0 0.0
    %1967 = vmatpush1.msra.mxu0 0.0
    %1968 = vmatprep.subr.mxu0 0.0
    %1969 = vmatpush1.msra.mxu0 0.0
    %1970 = vmatprep.subr.mxu0 0.0
    %1971 = vmatpush1.msra.mxu0 0.0
    %1972 = vmatprep.subr.mxu0 0.0
    %1973 = vmatpush1.msra.mxu0 0.0
    %1974 = vmatprep.subr.mxu0 0.0
    %1975 = vmatpush1.msra.mxu0 0.0
    %1976 = vmatprep.subr.mxu0 0.0
    %1977 = vmatpush1.msra.mxu0 0.0
    %1978 = vmatprep.subr.mxu0 0.0
    %1979 = vmatpush1.msra.mxu0 0.0
    %1980 = vmatprep.subr.mxu0 0.0
    %1981 = vmatpush1.msra.mxu0 0.0
    %1982 = vmatprep.subr.mxu0 0.0
    %1983 = vmatpush1.msra.mxu0 0.0
    %1984 = vmatprep.subr.mxu0 0.0
    %1985 = vmatpush1.msra.mxu0 0.0
    %1986 = vmatprep.subr.mxu0 0.0
    %1987 = vmatpush1.msra.mxu0 0.0
    %1988 = vmatprep.subr.mxu0 0.0
    %1989 = vmatpush1.msra.mxu0 0.0
    %1990 = vmatprep.subr.mxu0 0.0
    %1991 = vmatpush1.msra.mxu0 0.0
    %1992 = vmatprep.subr.mxu0 0.0
    %1993 = vmatpush1.msra.mxu0 0.0
    %1994 = vmatprep.subr.mxu0 0.0
    %1995 = vmatpush1.msra.mxu0 0.0
    %1996 = vmatprep.mubr.f32.mxu0 0.0
    %1997 = vmatmul.mubr.f32.gmra.mrb[0].mxu0 %v1930
    %v1998 = vpop.f32.mrb[0].mxu0
    %v1999 = vadd.f32 %v1925, %v1998
    %v2000 = vpop.f32.mrb[0].mxu0
    %2001 = vdwg.mxu0
    %v2002 = vadd.f32 %v1999, %v126
    %v2003 = vtanh.pop %v2002
    %v2004 = vld [vmem:[#allocation10] sm:$0xff]
    %v2005 = vld [vmem:[#allocation10 + $0x8] sm:$0xff]
    %v2006 = vld [vmem:[#allocation10 + $0x10] sm:$0xff]
    %v2007 = vld [vmem:[#allocation10 + $0x18] sm:$0xff]
    %v2008 = vld [vmem:[%s8] sm:$0x1]
    %v2010 = vlaneseq
    %v2011 = vshrl.u32 %v2010, 7
    %v2012 = vsub.s32 0, %v2011
    %v2013 = vrot.slane %v2008, %v2012
    %v2016 = vsel %vm219, %v2003, 0
    %2018 = vmatprep.subr.mxu0 0.0
    %2019 = vmatpush1.msra.mxu0 %v2004
    %2020 = vmatprep.subr.mxu0 0.0
    %2021 = vmatpush1.msra.mxu0 %v2005
    %2022 = vmatprep.subr.mxu0 0.0
    %2023 = vmatpush1.msra.mxu0 %v2006
    %2024 = vmatprep.subr.mxu0 0.0
    %2025 = vmatpush1.msra.mxu0 %v2007
    %2026 = vmatprep.subr.mxu0 0.0
    %2027 = vmatpush1.msra.mxu0 0.0
    %2028 = vmatprep.subr.mxu0 0.0
    %2029 = vmatpush1.msra.mxu0 0.0
    %2030 = vmatprep.subr.mxu0 0.0
    %2031 = vmatpush1.msra.mxu0 0.0
    %2032 = vmatprep.subr.mxu0 0.0
    %2033 = vmatpush1.msra.mxu0 0.0
    %2034 = vmatprep.subr.mxu0 0.0
    %2035 = vmatpush1.msra.mxu0 0.0
    %2036 = vmatprep.subr.mxu0 0.0
    %2037 = vmatpush1.msra.mxu0 0.0
    %2038 = vmatprep.subr.mxu0 0.0
    %2039 = vmatpush1.msra.mxu0 0.0
    %2040 = vmatprep.subr.mxu0 0.0
    %2041 = vmatpush1.msra.mxu0 0.0
    %2042 = vmatprep.subr.mxu0 0.0
    %2043 = vmatpush1.msra.mxu0 0.0
    %2044 = vmatprep.subr.mxu0 0.0
    %2045 = vmatpush1.msra.mxu0 0.0
    %2046 = vmatprep.subr.mxu0 0.0
    %2047 = vmatpush1.msra.mxu0 0.0
    %2048 = vmatprep.subr.mxu0 0.0
    %2049 = vmatpush1.msra.mxu0 0.0
    %2050 = vmatprep.subr.mxu0 0.0
    %2051 = vmatpush1.msra.mxu0 0.0
    %2052 = vmatprep.subr.mxu0 0.0
    %2053 = vmatpush1.msra.mxu0 0.0
    %2054 = vmatprep.subr.mxu0 0.0
    %2055 = vmatpush1.msra.mxu0 0.0
    %2056 = vmatprep.subr.mxu0 0.0
    %2057 = vmatpush1.msra.mxu0 0.0
    %2058 = vmatprep.subr.mxu0 0.0
    %2059 = vmatpush1.msra.mxu0 0.0
    %2060 = vmatprep.subr.mxu0 0.0
    %2061 = vmatpush1.msra.mxu0 0.0
    %2062 = vmatprep.subr.mxu0 0.0
    %2063 = vmatpush1.msra.mxu0 0.0
    %2064 = vmatprep.subr.mxu0 0.0
    %2065 = vmatpush1.msra.mxu0 0.0
    %2066 = vmatprep.subr.mxu0 0.0
    %2067 = vmatpush1.msra.mxu0 0.0
    %2068 = vmatprep.subr.mxu0 0.0
    %2069 = vmatpush1.msra.mxu0 0.0
    %2070 = vmatprep.subr.mxu0 0.0
    %2071 = vmatpush1.msra.mxu0 0.0
    %2072 = vmatprep.subr.mxu0 0.0
    %2073 = vmatpush1.msra.mxu0 0.0
    %2074 = vmatprep.subr.mxu0 0.0
    %2075 = vmatpush1.msra.mxu0 0.0
    %2076 = vmatprep.subr.mxu0 0.0
    %2077 = vmatpush1.msra.mxu0 0.0
    %2078 = vmatprep.subr.mxu0 0.0
    %2079 = vmatpush1.msra.mxu0 0.0
    %2080 = vmatprep.subr.mxu0 0.0
    %2081 = vmatpush1.msra.mxu0 0.0
    %2082 = vmatprep.mubr.f32.mxu0 0.0
    %2083 = vmatmul.mubr.f32.gmra.mrb[0].mxu0 %v2016
    %v2084 = vpop.f32.mrb[0].mxu0
    %v2085 = vadd.f32 %v2013, %v2084
    %v2086 = vpop.f32.mrb[0].mxu0
    %2087 = vdwg.mxu0
    %v2088 = vmax.f32 %v2085, 0.0
    %v2089 = vld [vmem:[%s9] sm:$0xff]
    %v2090 = vld [vmem:[%s9 + $0x8] sm:$0xff]
    %v2091 = vld [vmem:[%s9 + $0x10] sm:$0xff]
    %v2092 = vld [vmem:[%s9 + $0x18] sm:$0xff]
    %v2093 = vld [vmem:[%s10] sm:$0x1]
    %v2095 = vlaneseq
    %v2096 = vshrl.u32 %v2095, 7
    %v2097 = vsub.s32 0, %v2096
    %v2098 = vrot.slane %v2093, %v2097
    %v2101 = vsel %vm219, %v2088, 0
    %2103 = vmatprep.subr.mxu0 0.0
    %2104 = vmatpush1.msra.mxu0 %v2089
    %2105 = vmatprep.subr.mxu0 0.0
    %2106 = vmatpush1.msra.mxu0 %v2090
    %2107 = vmatprep.subr.mxu0 0.0
    %2108 = vmatpush1.msra.mxu0 %v2091
    %2109 = vmatprep.subr.mxu0 0.0
    %2110 = vmatpush1.msra.mxu0 %v2092
    %2111 = vmatprep.subr.mxu0 0.0
    %2112 = vmatpush1.msra.mxu0 0.0
    %2113 = vmatprep.subr.mxu0 0.0
    %2114 = vmatpush1.msra.mxu0 0.0
    %2115 = vmatprep.subr.mxu0 0.0
    %2116 = vmatpush1.msra.mxu0 0.0
    %2117 = vmatprep.subr.mxu0 0.0
    %2118 = vmatpush1.msra.mxu0 0.0
    %2119 = vmatprep.subr.mxu0 0.0
    %2120 = vmatpush1.msra.mxu0 0.0
    %2121 = vmatprep.subr.mxu0 0.0
    %2122 = vmatpush1.msra.mxu0 0.0
    %2123 = vmatprep.subr.mxu0 0.0
    %2124 = vmatpush1.msra.mxu0 0.0
    %2125 = vmatprep.subr.mxu0 0.0
    %2126 = vmatpush1.msra.mxu0 0.0
    %2127 = vmatprep.subr.mxu0 0.0
    %2128 = vmatpush1.msra.mxu0 0.0
    %2129 = vmatprep.subr.mxu0 0.0
    %2130 = vmatpush1.msra.mxu0 0.0
    %2131 = vmatprep.subr.mxu0 0.0
    %2132 = vmatpush1.msra.mxu0 0.0
    %2133 = vmatprep.subr.mxu0 0.0
    %2134 = vmatpush1.msra.mxu0 0.0
    %2135 = vmatprep.subr.mxu0 0.0
    %2136 = vmatpush1.msra.mxu0 0.0
    %2137 = vmatprep.subr.mxu0 0.0
    %2138 = vmatpush1.msra.mxu0 0.0
    %2139 = vmatprep.subr.mxu0 0.0
    %2140 = vmatpush1.msra.mxu0 0.0
    %2141 = vmatprep.subr.mxu0 0.0
    %2142 = vmatpush1.msra.mxu0 0.0
    %2143 = vmatprep.subr.mxu0 0.0
    %2144 = vmatpush1.msra.mxu0 0.0
    %2145 = vmatprep.subr.mxu0 0.0
    %2146 = vmatpush1.msra.mxu0 0.0
    %2147 = vmatprep.subr.mxu0 0.0
    %2148 = vmatpush1.msra.mxu0 0.0
    %2149 = vmatprep.subr.mxu0 0.0
    %2150 = vmatpush1.msra.mxu0 0.0
    %2151 = vmatprep.subr.mxu0 0.0
    %2152 = vmatpush1.msra.mxu0 0.0
    %2153 = vmatprep.subr.mxu0 0.0
    %2154 = vmatpush1.msra.mxu0 0.0
    %2155 = vmatprep.subr.mxu0 0.0
    %2156 = vmatpush1.msra.mxu0 0.0
    %2157 = vmatprep.subr.mxu0 0.0
    %2158 = vmatpush1.msra.mxu0 0.0
    %2159 = vmatprep.subr.mxu0 0.0
    %2160 = vmatpush1.msra.mxu0 0.0
    %2161 = vmatprep.subr.mxu0 0.0
    %2162 = vmatpush1.msra.mxu0 0.0
    %2163 = vmatprep.subr.mxu0 0.0
    %2164 = vmatpush1.msra.mxu0 0.0
    %2165 = vmatprep.subr.mxu0 0.0
    %2166 = vmatpush1.msra.mxu0 0.0
    %2167 = vmatprep.mubr.f32.mxu0 0.0
    %2168 = vmatmul.mubr.f32.gmra.mrb[0].mxu0 %v2101
    %v2169 = vpop.f32.mrb[0].mxu0
    %v2170 = vadd.f32 %v2098, %v2169
    %v2171 = vpop.f32.mrb[0].mxu0
    %2172 = vdwg.mxu0
    %vm2173 = vcmask 25600
    %2174 = vst.msk [vmem:[#allocation11] sm:$0x3] %vm2173, %v2170
    // Predicated region
    $region66: #{tpu_custom_call.1} parent=1 // pred_check
      _
    $region67: #{tpu_custom_call.1} parent=1 // pred_check_branch
      %2176 = sbr.rel (0) target = $region69
    $region68: #{tpu_custom_call.1} parent=1 // pred_region
      %s2178 = ssub.s32 32, 32
      %2179 = vsyncadd [#allocation4], %s2178
      %s2181 = sshll.u32 [#allocation11], 4
      %s2182 = int_to_ptr.vmem [resolvable:$true] %s2181
      %2184 = dma.vmem_to_hbm [thread:$0]  %s2182, 32, %s11, [#allocation4]
    $region69: #{tpu_custom_call.1} parent=1 // pred_fallthru
      _
    // Predicated region
    $region70: #{tpu_custom_call.1} parent=1 // pred_check
      _
    $region71: #{tpu_custom_call.1} parent=1 // pred_check_branch
      %2186 = sbr.rel (0) target = $region73
    $region72: #{tpu_custom_call.1} parent=1 // pred_region
      %2187 = dma.done [#allocation4], 32
    $region73: #{tpu_custom_call.1} parent=1 // pred_fallthru
      _
    %2188 = vsyncpa [#allocation3], 1
    %2189 = vsyncpa [#allocation6], 1
    %2190 = vsyncpa [#allocation9], 1
    %2191 = vsyncpa [#allocation4], 1

</llo_original>
